<compile_context>
chip_gen: v5e
topology: v5e:2x2
jax: 0.10.0
libtpu: 0.0.40
codegen_flags: <defaults>
</compile_context>

<pallas_src>
import functools

import jax
import jax.numpy as jnp
from jax import lax
from jax.experimental import pallas as pl
from jax.experimental.pallas import tpu as pltpu


# ----------------------------- Pallas kernel --------------------------------

def _trunk_loss_kernel(*refs, n_terms, targets, denom):
    """Fused conv1..conv4 + classifier + LSGAN MSE for one loss term per grid step.

    refs = (x_0[, x_1], s1, r1, b1, ..., s4, r4, b4, wc, bc, out_ref)
      x_i : (B*H, W*Cin) bf16 flattened NHWC inputs (fake / real).
      s_l : (3, B*Ho, B*Hi) bf16 0/1 height-gather matrices.
      r_l : (3, Wi*Ci, Wo*Co) bf16 width+channel-folded conv weights.
      b_l : (1, Wo*Co) f32 broadcast bias rows.
      wc  : (1, C4) f32 classifier weights; bc: (1, 1) f32 classifier bias.
      out : (1, 1, 128) f32 per-term loss block (lane-dense broadcast).
    """
    out_ref = refs[-1]
    x_refs = refs[:n_terms]
    (s1, r1, b1, s2, r2, b2, s3, r3, b3,
     s4, r4, b4, wc, bc) = refs[n_terms:-1]

    if n_terms == 1:
        a = x_refs[0][...]
        tgt = targets[0]
    else:
        first = pl.program_id(0) == 0
        a = jnp.where(first, x_refs[0][...], x_refs[1][...])
        tgt = jnp.where(first, targets[0], targets[1])

    def conv(a_bf16, s_ref, r_ref, b_ref, leaky):
        acc = b_ref[...]                                      # (1, Wo*Co) f32 bias
        for k in range(3):                                    # unrolled kh taps
            g = jnp.dot(s_ref[k], a_bf16,                     # height gather (MXU)
                        preferred_element_type=jnp.float32).astype(jnp.bfloat16)
            acc = acc + jnp.dot(g, r_ref[k],                  # width+channel GEMM
                                preferred_element_type=jnp.float32)
        if leaky:
            return jnp.where(acc > 0.0, acc, 0.2 * acc)       # LeakyReLU(0.2), f32
        return jnp.maximum(acc, 0.0)                          # ReLU, f32

    a = conv(a, s1, r1, b1, leaky=False).astype(jnp.bfloat16)
    a = conv(a, s2, r2, b2, leaky=False).astype(jnp.bfloat16)
    a = conv(a, s3, r3, b3, leaky=False).astype(jnp.bfloat16)
    a = conv(a, s4, r4, b4, leaky=True)                       # keep f32 for epilogue

    # 1x1 classifier with a single output channel: VPU multiply + lane reduce.
    logits = jnp.sum(a * wc[...], axis=-1, keepdims=True) + bc[...]   # (B*Hf, 1)
    d = logits - tgt
    term = jnp.sum(d * d) * (1.0 / float(denom))
    out_ref[...] = jnp.full(out_ref.shape, term, dtype=out_ref.dtype)


def _fused_loss(xs, prep, targets):
    n = len(xs)
    args = tuple(xs) + prep["args"]

    def full_spec(a):
        nd = a.ndim
        return pl.BlockSpec(a.shape, lambda i, _nd=nd: (0,) * _nd)

    out = pl.pallas_call(
        functools.partial(_trunk_loss_kernel, n_terms=n, targets=targets,
                          denom=prep["denom"]),
        out_shape=jax.ShapeDtypeStruct((n, 1, 128), jnp.float32),
        grid=(n,),
        in_specs=[full_spec(a) for a in args],
        out_specs=pl.BlockSpec((1, 1, 128), lambda i: (i, 0, 0)),
        compiler_params=pltpu.CompilerParams(
            dimension_semantics=("parallel",),       # fake/real -> 2 TCs on v7x
            vmem_limit_bytes=32 * 1024 * 1024),      # explicit; actual use < 0.5 MiB
    )(*args)
    return jnp.sum(out[:, 0, 0])


# --------------------------- weight preparation ------------------------------

def _fold_layer(w_oihw, bias, hi, wi, batch, stride=2, pad=1):
    """Fold one 3x3 conv into height-gather (S) + width/channel GEMM (R) weights."""
    co, ci, kh, kw = w_oihw.shape
    ho = (hi + 2 * pad - kh) // stride + 1
    wo = (wi + 2 * pad - kw) // stride + 1
    f32 = jnp.float32

    # S[k, b*Ho+ho, b*Hi+hi] = [hi == stride*ho + k - pad]  (0/1, exact in bf16)
    oh, ih = jnp.arange(ho), jnp.arange(hi)
    sel_h = jnp.stack([(oh[:, None] * stride + k - pad) == ih[None, :]
                       for k in range(kh)]).astype(f32)
    s = jnp.einsum("khx,bc->kbhcx", sel_h, jnp.eye(batch, dtype=f32))
    s = s.reshape(kh, batch * ho, batch * hi).astype(jnp.bfloat16)

    # R[k, wi*Ci+ci, wo*Co+co] = sum_kw [wi == stride*wo + kw - pad] * W[co,ci,k,kw]
    ow, iw = jnp.arange(wo), jnp.arange(wi)
    sel_w = jnp.stack([iw[:, None] == (ow[None, :] * stride + k - pad)
                       for k in range(kw)]).astype(f32)
    r = jnp.einsum("kxw,oihk->hxiwo", sel_w, w_oihw.astype(f32))
    r = r.reshape(kh, wi * ci, wo * co).astype(jnp.bfloat16)

    b_row = jnp.tile(bias.astype(f32), wo).reshape(1, wo * co)
    return s, r, b_row, ho, wo


def prepare_discriminator(params, height, width, batch):
    """One-time transformation of PyTorch-layout conv weights for the kernel."""
    args = []
    h, w_sp = height, width
    for name in ("conv1", "conv2", "conv3", "conv4"):
        wgt, bias = params[name]
        s, r, b_row, h, w_sp = _fold_layer(wgt, bias, h, w_sp, batch)
        args.extend([s, r, b_row])
    wc, bc = params["classifier"]
    # Classifier (1x1 conv, 1 output channel) fused as VPU multiply + lane reduce.
    # TODO(synk): general fold for final spatial width > 1 not implemented.
    assert w_sp == 1, "fused classifier reduction requires final width == 1"
    c4 = wc.shape[1]
    args.append(wc.reshape(1, c4).astype(jnp.float32))
    args.append(bc.reshape(1, 1).astype(jnp.float32))
    return {"args": tuple(args), "out_hw": (h, w_sp), "batch": batch,
            "denom": batch * h * w_sp}


# --------------------------- FCDiscriminator ---------------------------------

def fc_discriminator_forward(prep, x_nchw, x2_nchw=None, mode=None):
    """Reproduces FCDiscriminator.forward (x = fake, x2 = real, mode dis/gen)."""
    def flat(x):
        b, c, h, w = x.shape
        return jnp.transpose(x, (0, 2, 3, 1)).reshape(b * h, w * c).astype(jnp.bfloat16)

    if mode == "dis":
        assert x2_nchw is not None and x2_nchw.shape == x_nchw.shape
        xs = (flat(x_nchw), flat(x2_nchw))     # fake -> target 1, real -> target 0
        targets = (1.0, 0.0)
    elif mode == "gen":
        xs = (flat(x_nchw),)
        targets = (0.0,)
    else:
        # TODO(synk): the torch module hits UnboundLocalError for other modes.
        raise ValueError("mode must be 'dis' or 'gen'")
    return _fused_loss(xs, prep, targets)


# ------------------------------- reference -----------------------------------

def ref_forward(params, x, x2, mode):
    def conv(x, wb, stride, pad):
        w, b = wb
        y = lax.conv_general_dilated(
            x, w, window_strides=(stride, stride),
            padding=((pad, pad), (pad, pad)),
            dimension_numbers=("NCHW", "OIHW", "NCHW"))
        return y + b.reshape(1, -1, 1, 1)

    def trunk(x):
        x = jnp.maximum(conv(x, params["conv1"], 2, 1), 0.0)
        x = jnp.maximum(conv(x, params["conv2"], 2, 1), 0.0)
        x = jnp.maximum(conv(x, params["conv3"], 2, 1), 0.0)
        x = conv(x, params["conv4"], 2, 1)
        x = jnp.where(x > 0.0, x, 0.2 * x)
        return conv(x, params["classifier"], 1, 0)

    out = trunk(x)
    if mode == "dis":
        out2 = trunk(x2)
        return jnp.mean(out2 ** 2) + jnp.mean((out - 1.0) ** 2)
    return jnp.mean(out ** 2)


# ---------------------------------- main --------------------------------------

if __name__ == "__main__":
    key = jax.random.PRNGKey(0)
    num_classes, planes = 4, 8          # args.num_classes = 4, small planes
    B, H, W = 2, 16, 16                 # 16 -> 8 -> 4 -> 2 -> 1 spatially

    keys = jax.random.split(key, 12)

    def conv_p(kw_, kb_, cin, cout, ksz):
        fan_in = float(ksz * ksz * cin)
        w = jax.random.normal(kw_, (cout, cin, ksz, ksz), jnp.float32) / (fan_in ** 0.5)
        b = 0.01 * jax.random.normal(kb_, (cout,), jnp.float32)
        return (w, b)

    params = {
        "conv1": conv_p(keys[0], keys[1], num_classes, planes, 3),
        "conv2": conv_p(keys[2], keys[3], planes, planes * 2, 3),
        "conv3": conv_p(keys[4], keys[5], planes * 2, planes * 4, 3),
        "conv4": conv_p(keys[6], keys[7], planes * 4, planes * 8, 3),
        "classifier": conv_p(keys[8], keys[9], planes * 8, 1, 1),
    }

    x_fake = jax.random.normal(keys[10], (B, num_classes, H, W), jnp.float32)
    x_real = jax.random.normal(keys[11], (B, num_classes, H, W), jnp.float32)

    # One-time weight transformation (height gathers + width/channel folded GEMMs).
    prep = prepare_discriminator(params, H, W, batch=B)

    loss_dis = fc_discriminator_forward(prep, x_fake, x_real, mode="dis")
    loss_gen = fc_discriminator_forward(prep, x_fake, mode="gen")
    jax.block_until_ready((loss_dis, loss_gen))

    ref_dis = ref_forward(params, x_fake, x_real, "dis")
    ref_gen = ref_forward(params, x_fake, None, "gen")

    # bf16 GEMM inputs (f32 accumulation) -> loosened tolerances vs f32 reference.
    assert jnp.allclose(loss_dis, ref_dis, rtol=5e-2, atol=1e-1), (loss_dis, ref_dis)
    assert jnp.allclose(loss_gen, ref_gen, rtol=5e-2, atol=1e-1), (loss_gen, ref_gen)

    print("KERNEL_OK")
</pallas_src>

<mosaic_0001>
module attributes {stable_mosaic.version = 11 : i64} {
  func.func @_trunk_loss_kernel(%arg0: i32, %arg1: memref<32x64xbf16, #tpu.memory_space<vmem>>, %arg2: memref<32x64xbf16, #tpu.memory_space<vmem>>, %arg3: memref<3x16x32xbf16, #tpu.memory_space<vmem>>, %arg4: memref<3x64x64xbf16, #tpu.memory_space<vmem>>, %arg5: memref<1x64xf32, #tpu.memory_space<vmem>>, %arg6: memref<3x8x16xbf16, #tpu.memory_space<vmem>>, %arg7: memref<3x64x64xbf16, #tpu.memory_space<vmem>>, %arg8: memref<1x64xf32, #tpu.memory_space<vmem>>, %arg9: memref<3x4x8xbf16, #tpu.memory_space<vmem>>, %arg10: memref<3x64x64xbf16, #tpu.memory_space<vmem>>, %arg11: memref<1x64xf32, #tpu.memory_space<vmem>>, %arg12: memref<3x2x4xbf16, #tpu.memory_space<vmem>>, %arg13: memref<3x64x64xbf16, #tpu.memory_space<vmem>>, %arg14: memref<1x64xf32, #tpu.memory_space<vmem>>, %arg15: memref<1x64xf32, #tpu.memory_space<vmem>>, %arg16: memref<1x1xf32, #tpu.memory_space<vmem>>, %arg17: memref<1x1x128xf32, #tpu.memory_space<vmem>>) attributes {dimension_semantics = [#tpu.dimension_semantics<parallel>], iteration_bounds = array<i64: 2>, scalar_prefetch = 0 : i64, scratch_operands = 0 : i64, tpu.core_type = #tpu.core_type<tc>, window_params = [{pipeline_mode = #tpu.pipeline_mode<synchronous>, transform_indices = @transform_0, window_bounds = array<i64: 32, 64>}, {pipeline_mode = #tpu.pipeline_mode<synchronous>, transform_indices = @transform_1, window_bounds = array<i64: 32, 64>}, {pipeline_mode = #tpu.pipeline_mode<synchronous>, transform_indices = @transform_2, window_bounds = array<i64: 3, 16, 32>}, {pipeline_mode = #tpu.pipeline_mode<synchronous>, transform_indices = @transform_3, window_bounds = array<i64: 3, 64, 64>}, {pipeline_mode = #tpu.pipeline_mode<synchronous>, transform_indices = @transform_4, window_bounds = array<i64: 1, 64>}, {pipeline_mode = #tpu.pipeline_mode<synchronous>, transform_indices = @transform_5, window_bounds = array<i64: 3, 8, 16>}, {pipeline_mode = #tpu.pipeline_mode<synchronous>, transform_indices = @transform_6, window_bounds = array<i64: 3, 64, 64>}, {pipeline_mode = #tpu.pipeline_mode<synchronous>, transform_indices = @transform_7, window_bounds = array<i64: 1, 64>}, {pipeline_mode = #tpu.pipeline_mode<synchronous>, transform_indices = @transform_8, window_bounds = array<i64: 3, 4, 8>}, {pipeline_mode = #tpu.pipeline_mode<synchronous>, transform_indices = @transform_9, window_bounds = array<i64: 3, 64, 64>}, {pipeline_mode = #tpu.pipeline_mode<synchronous>, transform_indices = @transform_10, window_bounds = array<i64: 1, 64>}, {pipeline_mode = #tpu.pipeline_mode<synchronous>, transform_indices = @transform_11, window_bounds = array<i64: 3, 2, 4>}, {pipeline_mode = #tpu.pipeline_mode<synchronous>, transform_indices = @transform_12, window_bounds = array<i64: 3, 64, 64>}, {pipeline_mode = #tpu.pipeline_mode<synchronous>, transform_indices = @transform_13, window_bounds = array<i64: 1, 64>}, {pipeline_mode = #tpu.pipeline_mode<synchronous>, transform_indices = @transform_14, window_bounds = array<i64: 1, 64>}, {pipeline_mode = #tpu.pipeline_mode<synchronous>, transform_indices = @transform_15, window_bounds = array<i64: 1, 1>}, {transform_indices = @transform_16, window_bounds = array<i64: 1, 1, 128>}]} {
    %c0_i32 = arith.constant 0 : i32
    %0 = arith.cmpi eq, %arg0, %c0_i32 : i32
    %c0 = arith.constant 0 : index
    %c0_0 = arith.constant 0 : index
    %1 = vector.load %arg1[%c0, %c0_0] : memref<32x64xbf16, #tpu.memory_space<vmem>>, vector<32x64xbf16>
    %c0_1 = arith.constant 0 : index
    %c0_2 = arith.constant 0 : index
    %2 = vector.load %arg2[%c0_1, %c0_2] : memref<32x64xbf16, #tpu.memory_space<vmem>>, vector<32x64xbf16>
    %3 = arith.select %0, %1, %2 : vector<32x64xbf16>
    %cst = arith.constant 1.000000e+00 : f32
    %cst_3 = arith.constant 0.000000e+00 : f32
    %4 = arith.select %0, %cst, %cst_3 : f32
    %c0_4 = arith.constant 0 : index
    %c0_5 = arith.constant 0 : index
    %5 = vector.load %arg5[%c0_4, %c0_5] : memref<1x64xf32, #tpu.memory_space<vmem>>, vector<1x64xf32>
    %c0_6 = arith.constant 0 : index
    %c0_7 = arith.constant 0 : index
    %c0_8 = arith.constant 0 : index
    %6 = vector.load %arg3[%c0_6, %c0_7, %c0_8] : memref<3x16x32xbf16, #tpu.memory_space<vmem>>, vector<1x16x32xbf16>
    %7 = vector.shape_cast %6 : vector<1x16x32xbf16> to vector<16x32xbf16>
    %cst_9 = arith.constant dense<0.000000e+00> : vector<16x64xf32>
    %8 = tpu.matmul %7, %3, %cst_9 {dimension_numbers = #tpu.dot_dimension_numbers<[1], [0], [0], [1], [0, 0, 1, 1], [], []>} : vector<16x32xbf16>, vector<32x64xbf16>, vector<16x64xf32> -> vector<16x64xf32>
    %9 = arith.truncf %8 : vector<16x64xf32> to vector<16x64xbf16>
    %c0_10 = arith.constant 0 : index
    %c0_11 = arith.constant 0 : index
    %c0_12 = arith.constant 0 : index
    %10 = vector.load %arg4[%c0_10, %c0_11, %c0_12] : memref<3x64x64xbf16, #tpu.memory_space<vmem>>, vector<1x64x64xbf16>
    %11 = vector.shape_cast %10 : vector<1x64x64xbf16> to vector<64x64xbf16>
    %cst_13 = arith.constant dense<0.000000e+00> : vector<16x64xf32>
    %12 = tpu.matmul %9, %11, %cst_13 {dimension_numbers = #tpu.dot_dimension_numbers<[1], [0], [0], [1], [0, 0, 1, 1], [], []>} : vector<16x64xbf16>, vector<64x64xbf16>, vector<16x64xf32> -> vector<16x64xf32>
    %13 = vector.broadcast %5 : vector<1x64xf32> to vector<16x64xf32>
    %14 = arith.addf %13, %12 : vector<16x64xf32>
    %c1 = arith.constant 1 : index
    %c0_14 = arith.constant 0 : index
    %c0_15 = arith.constant 0 : index
    %15 = vector.load %arg3[%c1, %c0_14, %c0_15] : memref<3x16x32xbf16, #tpu.memory_space<vmem>>, vector<1x16x32xbf16>
    %16 = vector.shape_cast %15 : vector<1x16x32xbf16> to vector<16x32xbf16>
    %cst_16 = arith.constant dense<0.000000e+00> : vector<16x64xf32>
    %17 = tpu.matmul %16, %3, %cst_16 {dimension_numbers = #tpu.dot_dimension_numbers<[1], [0], [0], [1], [0, 0, 1, 1], [], []>} : vector<16x32xbf16>, vector<32x64xbf16>, vector<16x64xf32> -> vector<16x64xf32>
    %18 = arith.truncf %17 : vector<16x64xf32> to vector<16x64xbf16>
    %c1_17 = arith.constant 1 : index
    %c0_18 = arith.constant 0 : index
    %c0_19 = arith.constant 0 : index
    %19 = vector.load %arg4[%c1_17, %c0_18, %c0_19] : memref<3x64x64xbf16, #tpu.memory_space<vmem>>, vector<1x64x64xbf16>
    %20 = vector.shape_cast %19 : vector<1x64x64xbf16> to vector<64x64xbf16>
    %cst_20 = arith.constant dense<0.000000e+00> : vector<16x64xf32>
    %21 = tpu.matmul %18, %20, %cst_20 {dimension_numbers = #tpu.dot_dimension_numbers<[1], [0], [0], [1], [0, 0, 1, 1], [], []>} : vector<16x64xbf16>, vector<64x64xbf16>, vector<16x64xf32> -> vector<16x64xf32>
    %22 = arith.addf %14, %21 : vector<16x64xf32>
    %c2 = arith.constant 2 : index
    %c0_21 = arith.constant 0 : index
    %c0_22 = arith.constant 0 : index
    %23 = vector.load %arg3[%c2, %c0_21, %c0_22] : memref<3x16x32xbf16, #tpu.memory_space<vmem>>, vector<1x16x32xbf16>
    %24 = vector.shape_cast %23 : vector<1x16x32xbf16> to vector<16x32xbf16>
    %cst_23 = arith.constant dense<0.000000e+00> : vector<16x64xf32>
    %25 = tpu.matmul %24, %3, %cst_23 {dimension_numbers = #tpu.dot_dimension_numbers<[1], [0], [0], [1], [0, 0, 1, 1], [], []>} : vector<16x32xbf16>, vector<32x64xbf16>, vector<16x64xf32> -> vector<16x64xf32>
    %26 = arith.truncf %25 : vector<16x64xf32> to vector<16x64xbf16>
    %c2_24 = arith.constant 2 : index
    %c0_25 = arith.constant 0 : index
    %c0_26 = arith.constant 0 : index
    %27 = vector.load %arg4[%c2_24, %c0_25, %c0_26] : memref<3x64x64xbf16, #tpu.memory_space<vmem>>, vector<1x64x64xbf16>
    %28 = vector.shape_cast %27 : vector<1x64x64xbf16> to vector<64x64xbf16>
    %cst_27 = arith.constant dense<0.000000e+00> : vector<16x64xf32>
    %29 = tpu.matmul %26, %28, %cst_27 {dimension_numbers = #tpu.dot_dimension_numbers<[1], [0], [0], [1], [0, 0, 1, 1], [], []>} : vector<16x64xbf16>, vector<64x64xbf16>, vector<16x64xf32> -> vector<16x64xf32>
    %30 = arith.addf %22, %29 : vector<16x64xf32>
    %cst_28 = arith.constant 0.000000e+00 : f32
    %31 = vector.broadcast %cst_28 : f32 to vector<16x64xf32>
    %32 = arith.maximumf %30, %31 : vector<16x64xf32>
    %33 = arith.truncf %32 : vector<16x64xf32> to vector<16x64xbf16>
    %c0_29 = arith.constant 0 : index
    %c0_30 = arith.constant 0 : index
    %34 = vector.load %arg8[%c0_29, %c0_30] : memref<1x64xf32, #tpu.memory_space<vmem>>, vector<1x64xf32>
    %c0_31 = arith.constant 0 : index
    %c0_32 = arith.constant 0 : index
    %c0_33 = arith.constant 0 : index
    %35 = vector.load %arg6[%c0_31, %c0_32, %c0_33] : memref<3x8x16xbf16, #tpu.memory_space<vmem>>, vector<1x8x16xbf16>
    %36 = vector.shape_cast %35 : vector<1x8x16xbf16> to vector<8x16xbf16>
    %cst_34 = arith.constant dense<0.000000e+00> : vector<8x64xf32>
    %37 = tpu.matmul %36, %33, %cst_34 {dimension_numbers = #tpu.dot_dimension_numbers<[1], [0], [0], [1], [0, 0, 1, 1], [], []>} : vector<8x16xbf16>, vector<16x64xbf16>, vector<8x64xf32> -> vector<8x64xf32>
    %38 = arith.truncf %37 : vector<8x64xf32> to vector<8x64xbf16>
    %c0_35 = arith.constant 0 : index
    %c0_36 = arith.constant 0 : index
    %c0_37 = arith.constant 0 : index
    %39 = vector.load %arg7[%c0_35, %c0_36, %c0_37] : memref<3x64x64xbf16, #tpu.memory_space<vmem>>, vector<1x64x64xbf16>
    %40 = vector.shape_cast %39 : vector<1x64x64xbf16> to vector<64x64xbf16>
    %cst_38 = arith.constant dense<0.000000e+00> : vector<8x64xf32>
    %41 = tpu.matmul %38, %40, %cst_38 {dimension_numbers = #tpu.dot_dimension_numbers<[1], [0], [0], [1], [0, 0, 1, 1], [], []>} : vector<8x64xbf16>, vector<64x64xbf16>, vector<8x64xf32> -> vector<8x64xf32>
    %42 = vector.broadcast %34 : vector<1x64xf32> to vector<8x64xf32>
    %43 = arith.addf %42, %41 : vector<8x64xf32>
    %c1_39 = arith.constant 1 : index
    %c0_40 = arith.constant 0 : index
    %c0_41 = arith.constant 0 : index
    %44 = vector.load %arg6[%c1_39, %c0_40, %c0_41] : memref<3x8x16xbf16, #tpu.memory_space<vmem>>, vector<1x8x16xbf16>
    %45 = vector.shape_cast %44 : vector<1x8x16xbf16> to vector<8x16xbf16>
    %cst_42 = arith.constant dense<0.000000e+00> : vector<8x64xf32>
    %46 = tpu.matmul %45, %33, %cst_42 {dimension_numbers = #tpu.dot_dimension_numbers<[1], [0], [0], [1], [0, 0, 1, 1], [], []>} : vector<8x16xbf16>, vector<16x64xbf16>, vector<8x64xf32> -> vector<8x64xf32>
    %47 = arith.truncf %46 : vector<8x64xf32> to vector<8x64xbf16>
    %c1_43 = arith.constant 1 : index
    %c0_44 = arith.constant 0 : index
    %c0_45 = arith.constant 0 : index
    %48 = vector.load %arg7[%c1_43, %c0_44, %c0_45] : memref<3x64x64xbf16, #tpu.memory_space<vmem>>, vector<1x64x64xbf16>
    %49 = vector.shape_cast %48 : vector<1x64x64xbf16> to vector<64x64xbf16>
    %cst_46 = arith.constant dense<0.000000e+00> : vector<8x64xf32>
    %50 = tpu.matmul %47, %49, %cst_46 {dimension_numbers = #tpu.dot_dimension_numbers<[1], [0], [0], [1], [0, 0, 1, 1], [], []>} : vector<8x64xbf16>, vector<64x64xbf16>, vector<8x64xf32> -> vector<8x64xf32>
    %51 = arith.addf %43, %50 : vector<8x64xf32>
    %c2_47 = arith.constant 2 : index
    %c0_48 = arith.constant 0 : index
    %c0_49 = arith.constant 0 : index
    %52 = vector.load %arg6[%c2_47, %c0_48, %c0_49] : memref<3x8x16xbf16, #tpu.memory_space<vmem>>, vector<1x8x16xbf16>
    %53 = vector.shape_cast %52 : vector<1x8x16xbf16> to vector<8x16xbf16>
    %cst_50 = arith.constant dense<0.000000e+00> : vector<8x64xf32>
    %54 = tpu.matmul %53, %33, %cst_50 {dimension_numbers = #tpu.dot_dimension_numbers<[1], [0], [0], [1], [0, 0, 1, 1], [], []>} : vector<8x16xbf16>, vector<16x64xbf16>, vector<8x64xf32> -> vector<8x64xf32>
    %55 = arith.truncf %54 : vector<8x64xf32> to vector<8x64xbf16>
    %c2_51 = arith.constant 2 : index
    %c0_52 = arith.constant 0 : index
    %c0_53 = arith.constant 0 : index
    %56 = vector.load %arg7[%c2_51, %c0_52, %c0_53] : memref<3x64x64xbf16, #tpu.memory_space<vmem>>, vector<1x64x64xbf16>
    %57 = vector.shape_cast %56 : vector<1x64x64xbf16> to vector<64x64xbf16>
    %cst_54 = arith.constant dense<0.000000e+00> : vector<8x64xf32>
    %58 = tpu.matmul %55, %57, %cst_54 {dimension_numbers = #tpu.dot_dimension_numbers<[1], [0], [0], [1], [0, 0, 1, 1], [], []>} : vector<8x64xbf16>, vector<64x64xbf16>, vector<8x64xf32> -> vector<8x64xf32>
    %59 = arith.addf %51, %58 : vector<8x64xf32>
    %cst_55 = arith.constant 0.000000e+00 : f32
    %60 = vector.broadcast %cst_55 : f32 to vector<8x64xf32>
    %61 = arith.maximumf %59, %60 : vector<8x64xf32>
    %62 = arith.truncf %61 : vector<8x64xf32> to vector<8x64xbf16>
    %c0_56 = arith.constant 0 : index
    %c0_57 = arith.constant 0 : index
    %63 = vector.load %arg11[%c0_56, %c0_57] : memref<1x64xf32, #tpu.memory_space<vmem>>, vector<1x64xf32>
    %c0_58 = arith.constant 0 : index
    %c0_59 = arith.constant 0 : index
    %c0_60 = arith.constant 0 : index
    %64 = vector.load %arg9[%c0_58, %c0_59, %c0_60] : memref<3x4x8xbf16, #tpu.memory_space<vmem>>, vector<1x4x8xbf16>
    %65 = vector.shape_cast %64 : vector<1x4x8xbf16> to vector<4x8xbf16>
    %cst_61 = arith.constant dense<0.000000e+00> : vector<4x64xf32>
    %66 = tpu.matmul %65, %62, %cst_61 {dimension_numbers = #tpu.dot_dimension_numbers<[1], [0], [0], [1], [0, 0, 1, 1], [], []>} : vector<4x8xbf16>, vector<8x64xbf16>, vector<4x64xf32> -> vector<4x64xf32>
    %67 = arith.truncf %66 : vector<4x64xf32> to vector<4x64xbf16>
    %c0_62 = arith.constant 0 : index
    %c0_63 = arith.constant 0 : index
    %c0_64 = arith.constant 0 : index
    %68 = vector.load %arg10[%c0_62, %c0_63, %c0_64] : memref<3x64x64xbf16, #tpu.memory_space<vmem>>, vector<1x64x64xbf16>
    %69 = vector.shape_cast %68 : vector<1x64x64xbf16> to vector<64x64xbf16>
    %cst_65 = arith.constant dense<0.000000e+00> : vector<4x64xf32>
    %70 = tpu.matmul %67, %69, %cst_65 {dimension_numbers = #tpu.dot_dimension_numbers<[1], [0], [0], [1], [0, 0, 1, 1], [], []>} : vector<4x64xbf16>, vector<64x64xbf16>, vector<4x64xf32> -> vector<4x64xf32>
    %71 = vector.broadcast %63 : vector<1x64xf32> to vector<4x64xf32>
    %72 = arith.addf %71, %70 : vector<4x64xf32>
    %c1_66 = arith.constant 1 : index
    %c0_67 = arith.constant 0 : index
    %c0_68 = arith.constant 0 : index
    %73 = vector.load %arg9[%c1_66, %c0_67, %c0_68] : memref<3x4x8xbf16, #tpu.memory_space<vmem>>, vector<1x4x8xbf16>
    %74 = vector.shape_cast %73 : vector<1x4x8xbf16> to vector<4x8xbf16>
    %cst_69 = arith.constant dense<0.000000e+00> : vector<4x64xf32>
    %75 = tpu.matmul %74, %62, %cst_69 {dimension_numbers = #tpu.dot_dimension_numbers<[1], [0], [0], [1], [0, 0, 1, 1], [], []>} : vector<4x8xbf16>, vector<8x64xbf16>, vector<4x64xf32> -> vector<4x64xf32>
    %76 = arith.truncf %75 : vector<4x64xf32> to vector<4x64xbf16>
    %c1_70 = arith.constant 1 : index
    %c0_71 = arith.constant 0 : index
    %c0_72 = arith.constant 0 : index
    %77 = vector.load %arg10[%c1_70, %c0_71, %c0_72] : memref<3x64x64xbf16, #tpu.memory_space<vmem>>, vector<1x64x64xbf16>
    %78 = vector.shape_cast %77 : vector<1x64x64xbf16> to vector<64x64xbf16>
    %cst_73 = arith.constant dense<0.000000e+00> : vector<4x64xf32>
    %79 = tpu.matmul %76, %78, %cst_73 {dimension_numbers = #tpu.dot_dimension_numbers<[1], [0], [0], [1], [0, 0, 1, 1], [], []>} : vector<4x64xbf16>, vector<64x64xbf16>, vector<4x64xf32> -> vector<4x64xf32>
    %80 = arith.addf %72, %79 : vector<4x64xf32>
    %c2_74 = arith.constant 2 : index
    %c0_75 = arith.constant 0 : index
    %c0_76 = arith.constant 0 : index
    %81 = vector.load %arg9[%c2_74, %c0_75, %c0_76] : memref<3x4x8xbf16, #tpu.memory_space<vmem>>, vector<1x4x8xbf16>
    %82 = vector.shape_cast %81 : vector<1x4x8xbf16> to vector<4x8xbf16>
    %cst_77 = arith.constant dense<0.000000e+00> : vector<4x64xf32>
    %83 = tpu.matmul %82, %62, %cst_77 {dimension_numbers = #tpu.dot_dimension_numbers<[1], [0], [0], [1], [0, 0, 1, 1], [], []>} : vector<4x8xbf16>, vector<8x64xbf16>, vector<4x64xf32> -> vector<4x64xf32>
    %84 = arith.truncf %83 : vector<4x64xf32> to vector<4x64xbf16>
    %c2_78 = arith.constant 2 : index
    %c0_79 = arith.constant 0 : index
    %c0_80 = arith.constant 0 : index
    %85 = vector.load %arg10[%c2_78, %c0_79, %c0_80] : memref<3x64x64xbf16, #tpu.memory_space<vmem>>, vector<1x64x64xbf16>
    %86 = vector.shape_cast %85 : vector<1x64x64xbf16> to vector<64x64xbf16>
    %cst_81 = arith.constant dense<0.000000e+00> : vector<4x64xf32>
    %87 = tpu.matmul %84, %86, %cst_81 {dimension_numbers = #tpu.dot_dimension_numbers<[1], [0], [0], [1], [0, 0, 1, 1], [], []>} : vector<4x64xbf16>, vector<64x64xbf16>, vector<4x64xf32> -> vector<4x64xf32>
    %88 = arith.addf %80, %87 : vector<4x64xf32>
    %cst_82 = arith.constant 0.000000e+00 : f32
    %89 = vector.broadcast %cst_82 : f32 to vector<4x64xf32>
    %90 = arith.maximumf %88, %89 : vector<4x64xf32>
    %91 = arith.truncf %90 : vector<4x64xf32> to vector<4x64xbf16>
    %c0_83 = arith.constant 0 : index
    %c0_84 = arith.constant 0 : index
    %92 = vector.load %arg14[%c0_83, %c0_84] : memref<1x64xf32, #tpu.memory_space<vmem>>, vector<1x64xf32>
    %c0_85 = arith.constant 0 : index
    %c0_86 = arith.constant 0 : index
    %c0_87 = arith.constant 0 : index
    %93 = vector.load %arg12[%c0_85, %c0_86, %c0_87] : memref<3x2x4xbf16, #tpu.memory_space<vmem>>, vector<1x2x4xbf16>
    %94 = vector.shape_cast %93 : vector<1x2x4xbf16> to vector<2x4xbf16>
    %cst_88 = arith.constant dense<0.000000e+00> : vector<2x64xf32>
    %95 = tpu.matmul %94, %91, %cst_88 {dimension_numbers = #tpu.dot_dimension_numbers<[1], [0], [0], [1], [0, 0, 1, 1], [], []>} : vector<2x4xbf16>, vector<4x64xbf16>, vector<2x64xf32> -> vector<2x64xf32>
    %96 = arith.truncf %95 : vector<2x64xf32> to vector<2x64xbf16>
    %c0_89 = arith.constant 0 : index
    %c0_90 = arith.constant 0 : index
    %c0_91 = arith.constant 0 : index
    %97 = vector.load %arg13[%c0_89, %c0_90, %c0_91] : memref<3x64x64xbf16, #tpu.memory_space<vmem>>, vector<1x64x64xbf16>
    %98 = vector.shape_cast %97 : vector<1x64x64xbf16> to vector<64x64xbf16>
    %cst_92 = arith.constant dense<0.000000e+00> : vector<2x64xf32>
    %99 = tpu.matmul %96, %98, %cst_92 {dimension_numbers = #tpu.dot_dimension_numbers<[1], [0], [0], [1], [0, 0, 1, 1], [], []>} : vector<2x64xbf16>, vector<64x64xbf16>, vector<2x64xf32> -> vector<2x64xf32>
    %100 = vector.broadcast %92 : vector<1x64xf32> to vector<2x64xf32>
    %101 = arith.addf %100, %99 : vector<2x64xf32>
    %c1_93 = arith.constant 1 : index
    %c0_94 = arith.constant 0 : index
    %c0_95 = arith.constant 0 : index
    %102 = vector.load %arg12[%c1_93, %c0_94, %c0_95] : memref<3x2x4xbf16, #tpu.memory_space<vmem>>, vector<1x2x4xbf16>
    %103 = vector.shape_cast %102 : vector<1x2x4xbf16> to vector<2x4xbf16>
    %cst_96 = arith.constant dense<0.000000e+00> : vector<2x64xf32>
    %104 = tpu.matmul %103, %91, %cst_96 {dimension_numbers = #tpu.dot_dimension_numbers<[1], [0], [0], [1], [0, 0, 1, 1], [], []>} : vector<2x4xbf16>, vector<4x64xbf16>, vector<2x64xf32> -> vector<2x64xf32>
    %105 = arith.truncf %104 : vector<2x64xf32> to vector<2x64xbf16>
    %c1_97 = arith.constant 1 : index
    %c0_98 = arith.constant 0 : index
    %c0_99 = arith.constant 0 : index
    %106 = vector.load %arg13[%c1_97, %c0_98, %c0_99] : memref<3x64x64xbf16, #tpu.memory_space<vmem>>, vector<1x64x64xbf16>
    %107 = vector.shape_cast %106 : vector<1x64x64xbf16> to vector<64x64xbf16>
    %cst_100 = arith.constant dense<0.000000e+00> : vector<2x64xf32>
    %108 = tpu.matmul %105, %107, %cst_100 {dimension_numbers = #tpu.dot_dimension_numbers<[1], [0], [0], [1], [0, 0, 1, 1], [], []>} : vector<2x64xbf16>, vector<64x64xbf16>, vector<2x64xf32> -> vector<2x64xf32>
    %109 = arith.addf %101, %108 : vector<2x64xf32>
    %c2_101 = arith.constant 2 : index
    %c0_102 = arith.constant 0 : index
    %c0_103 = arith.constant 0 : index
    %110 = vector.load %arg12[%c2_101, %c0_102, %c0_103] : memref<3x2x4xbf16, #tpu.memory_space<vmem>>, vector<1x2x4xbf16>
    %111 = vector.shape_cast %110 : vector<1x2x4xbf16> to vector<2x4xbf16>
    %cst_104 = arith.constant dense<0.000000e+00> : vector<2x64xf32>
    %112 = tpu.matmul %111, %91, %cst_104 {dimension_numbers = #tpu.dot_dimension_numbers<[1], [0], [0], [1], [0, 0, 1, 1], [], []>} : vector<2x4xbf16>, vector<4x64xbf16>, vector<2x64xf32> -> vector<2x64xf32>
    %113 = arith.truncf %112 : vector<2x64xf32> to vector<2x64xbf16>
    %c2_105 = arith.constant 2 : index
    %c0_106 = arith.constant 0 : index
    %c0_107 = arith.constant 0 : index
    %114 = vector.load %arg13[%c2_105, %c0_106, %c0_107] : memref<3x64x64xbf16, #tpu.memory_space<vmem>>, vector<1x64x64xbf16>
    %115 = vector.shape_cast %114 : vector<1x64x64xbf16> to vector<64x64xbf16>
    %cst_108 = arith.constant dense<0.000000e+00> : vector<2x64xf32>
    %116 = tpu.matmul %113, %115, %cst_108 {dimension_numbers = #tpu.dot_dimension_numbers<[1], [0], [0], [1], [0, 0, 1, 1], [], []>} : vector<2x64xbf16>, vector<64x64xbf16>, vector<2x64xf32> -> vector<2x64xf32>
    %117 = arith.addf %109, %116 : vector<2x64xf32>
    %cst_109 = arith.constant 0.000000e+00 : f32
    %118 = vector.broadcast %cst_109 : f32 to vector<2x64xf32>
    %119 = arith.cmpf ogt, %117, %118 : vector<2x64xf32>
    %cst_110 = arith.constant 2.000000e-01 : f32
    %120 = vector.broadcast %cst_110 : f32 to vector<2x64xf32>
    %121 = arith.mulf %120, %117 : vector<2x64xf32>
    %122 = arith.select %119, %117, %121 : vector<2x64xi1>, vector<2x64xf32>
    %c0_111 = arith.constant 0 : index
    %c0_112 = arith.constant 0 : index
    %123 = vector.load %arg15[%c0_111, %c0_112] : memref<1x64xf32, #tpu.memory_space<vmem>>, vector<1x64xf32>
    %124 = vector.broadcast %123 : vector<1x64xf32> to vector<2x64xf32>
    %125 = arith.mulf %122, %124 : vector<2x64xf32>
    %cst_113 = arith.constant dense<0.000000e+00> : vector<2xf32>
    %126 = vector.multi_reduction <add>, %125, %cst_113 [1] : vector<2x64xf32> to vector<2xf32>
    %127 = vector.shape_cast %126 : vector<2xf32> to vector<2x1xf32>
    %c0_114 = arith.constant 0 : index
    %c0_115 = arith.constant 0 : index
    %128 = vector.load %arg16[%c0_114, %c0_115] : memref<1x1xf32, #tpu.memory_space<vmem>>, vector<1x1xf32>
    %129 = vector.broadcast %128 : vector<1x1xf32> to vector<2x1xf32>
    %130 = arith.addf %127, %129 : vector<2x1xf32>
    %131 = vector.broadcast %4 : f32 to vector<2x1xf32>
    %132 = arith.subf %130, %131 : vector<2x1xf32>
    %133 = arith.mulf %132, %132 : vector<2x1xf32>
    %134 = vector.shape_cast %133 : vector<2x1xf32> to vector<1x2x1xf32>
    %cst_116 = arith.constant dense<0.000000e+00> : vector<1xf32>
    %135 = vector.multi_reduction <add>, %134, %cst_116 [1, 2] : vector<1x2x1xf32> to vector<1xf32>
    %136 = vector.shape_cast %135 : vector<1xf32> to vector<1x1x1xf32>
    %137 = vector.extract %136[0, 0, 0] : f32 from vector<1x1x1xf32>
    %cst_117 = arith.constant 5.000000e-01 : f32
    %138 = arith.mulf %137, %cst_117 : f32
    %139 = vector.broadcast %138 : f32 to vector<1x1x128xf32>
    %c0_118 = arith.constant 0 : index
    %c0_119 = arith.constant 0 : index
    %c0_120 = arith.constant 0 : index
    %140 = vector.load %arg17[%c0_118, %c0_119, %c0_120] : memref<1x1x128xf32, #tpu.memory_space<vmem>>, vector<1x1x128xf32>
    tpu.vector_store %arg17[%c0_118, %c0_119, %c0_120], %139 {strides = array<i32>} : memref<1x1x128xf32, #tpu.memory_space<vmem>>, vector<1x1x128xf32>,
    return
  }
  func.func @transform_0(%arg0: i32) -> (i32, i32) {
    %c0_i32 = arith.constant 0 : i32
    %c0_i32_0 = arith.constant 0 : i32
    %c0_i32_1 = arith.constant 0 : i32
    return %c0_i32, %c0_i32_0 : i32, i32
  }
  func.func @transform_1(%arg0: i32) -> (i32, i32) {
    %c0_i32 = arith.constant 0 : i32
    %c0_i32_0 = arith.constant 0 : i32
    %c0_i32_1 = arith.constant 0 : i32
    return %c0_i32, %c0_i32_0 : i32, i32
  }
  func.func @transform_2(%arg0: i32) -> (i32, i32, i32) {
    %c0_i32 = arith.constant 0 : i32
    %c0_i32_0 = arith.constant 0 : i32
    %c0_i32_1 = arith.constant 0 : i32
    %c0_i32_2 = arith.constant 0 : i32
    return %c0_i32, %c0_i32_0, %c0_i32_1 : i32, i32, i32
  }
  func.func @transform_3(%arg0: i32) -> (i32, i32, i32) {
    %c0_i32 = arith.constant 0 : i32
    %c0_i32_0 = arith.constant 0 : i32
    %c0_i32_1 = arith.constant 0 : i32
    %c0_i32_2 = arith.constant 0 : i32
    return %c0_i32, %c0_i32_0, %c0_i32_1 : i32, i32, i32
  }
  func.func @transform_4(%arg0: i32) -> (i32, i32) {
    %c0_i32 = arith.constant 0 : i32
    %c0_i32_0 = arith.constant 0 : i32
    %c0_i32_1 = arith.constant 0 : i32
    return %c0_i32, %c0_i32_0 : i32, i32
  }
  func.func @transform_5(%arg0: i32) -> (i32, i32, i32) {
    %c0_i32 = arith.constant 0 : i32
    %c0_i32_0 = arith.constant 0 : i32
    %c0_i32_1 = arith.constant 0 : i32
    %c0_i32_2 = arith.constant 0 : i32
    return %c0_i32, %c0_i32_0, %c0_i32_1 : i32, i32, i32
  }
  func.func @transform_6(%arg0: i32) -> (i32, i32, i32) {
    %c0_i32 = arith.constant 0 : i32
    %c0_i32_0 = arith.constant 0 : i32
    %c0_i32_1 = arith.constant 0 : i32
    %c0_i32_2 = arith.constant 0 : i32
    return %c0_i32, %c0_i32_0, %c0_i32_1 : i32, i32, i32
  }
  func.func @transform_7(%arg0: i32) -> (i32, i32) {
    %c0_i32 = arith.constant 0 : i32
    %c0_i32_0 = arith.constant 0 : i32
    %c0_i32_1 = arith.constant 0 : i32
    return %c0_i32, %c0_i32_0 : i32, i32
  }
  func.func @transform_8(%arg0: i32) -> (i32, i32, i32) {
    %c0_i32 = arith.constant 0 : i32
    %c0_i32_0 = arith.constant 0 : i32
    %c0_i32_1 = arith.constant 0 : i32
    %c0_i32_2 = arith.constant 0 : i32
    return %c0_i32, %c0_i32_0, %c0_i32_1 : i32, i32, i32
  }
  func.func @transform_9(%arg0: i32) -> (i32, i32, i32) {
    %c0_i32 = arith.constant 0 : i32
    %c0_i32_0 = arith.constant 0 : i32
    %c0_i32_1 = arith.constant 0 : i32
    %c0_i32_2 = arith.constant 0 : i32
    return %c0_i32, %c0_i32_0, %c0_i32_1 : i32, i32, i32
  }
  func.func @transform_10(%arg0: i32) -> (i32, i32) {
    %c0_i32 = arith.constant 0 : i32
    %c0_i32_0 = arith.constant 0 : i32
    %c0_i32_1 = arith.constant 0 : i32
    return %c0_i32, %c0_i32_0 : i32, i32
  }
  func.func @transform_11(%arg0: i32) -> (i32, i32, i32) {
    %c0_i32 = arith.constant 0 : i32
    %c0_i32_0 = arith.constant 0 : i32
    %c0_i32_1 = arith.constant 0 : i32
    %c0_i32_2 = arith.constant 0 : i32
    return %c0_i32, %c0_i32_0, %c0_i32_1 : i32, i32, i32
  }
  func.func @transform_12(%arg0: i32) -> (i32, i32, i32) {
    %c0_i32 = arith.constant 0 : i32
    %c0_i32_0 = arith.constant 0 : i32
    %c0_i32_1 = arith.constant 0 : i32
    %c0_i32_2 = arith.constant 0 : i32
    return %c0_i32, %c0_i32_0, %c0_i32_1 : i32, i32, i32
  }
  func.func @transform_13(%arg0: i32) -> (i32, i32) {
    %c0_i32 = arith.constant 0 : i32
    %c0_i32_0 = arith.constant 0 : i32
    %c0_i32_1 = arith.constant 0 : i32
    return %c0_i32, %c0_i32_0 : i32, i32
  }
  func.func @transform_14(%arg0: i32) -> (i32, i32) {
    %c0_i32 = arith.constant 0 : i32
    %c0_i32_0 = arith.constant 0 : i32
    %c0_i32_1 = arith.constant 0 : i32
    return %c0_i32, %c0_i32_0 : i32, i32
  }
  func.func @transform_15(%arg0: i32) -> (i32, i32) {
    %c0_i32 = arith.constant 0 : i32
    %c0_i32_0 = arith.constant 0 : i32
    %c0_i32_1 = arith.constant 0 : i32
    return %c0_i32, %c0_i32_0 : i32, i32
  }
  func.func @transform_16(%arg0: i32) -> (i32, i32, i32) {
    %c0_i32 = arith.constant 0 : i32
    %c0_i32_0 = arith.constant 0 : i32
    %c0_i32_1 = arith.constant 0 : i32
    return %arg0, %c0_i32, %c0_i32_0 : i32, i32, i32
  }
}

</mosaic_0001>

<llo_original>
// kernel: tpu_custom_call.1
$region0: #{tpu_custom_call.1}
  #allocation0 [shape = 'u32[]', space=smem, size = 0x4, offset = 0x4, fixed_abs, tag = 'smem constant byte address 0x4 - core index']
  #allocation1 [shape = 'u32[72,128]{1,0:T(1,128)}', space=vmem, size = 0x9000, scoped, tag = 'internal scratch']
  #allocation2 [shape = 'f32[1,1]{1,0:T(1,128)S(1)}', space=vmem, size = 0x200, scoped, tag = 'scoped memory for tpu_custom_call.1']
  %s0 = inlined_call_operand.hbm [shape: bf16[32,64], index: 0, kind: input, shape index: {}]
  %s1 = inlined_call_operand.hbm [shape: bf16[32,64], index: 1, kind: input, shape index: {}]
  %s2 = inlined_call_operand.hbm [shape: bf16[3,16,32], index: 2, kind: input, shape index: {}]
  %s3 = inlined_call_operand.hbm [shape: bf16[3,64,64], index: 3, kind: input, shape index: {}]
  %s4 = inlined_call_operand.hbm [shape: f32[1,64], index: 4, kind: input, shape index: {}]
  %s5 = inlined_call_operand.hbm [shape: bf16[3,8,16], index: 5, kind: input, shape index: {}]
  %s6 = inlined_call_operand.hbm [shape: bf16[3,64,64], index: 6, kind: input, shape index: {}]
  %s7 = inlined_call_operand.hbm [shape: f32[1,64], index: 7, kind: input, shape index: {}]
  %s8 = inlined_call_operand.vmem [shape: bf16[3,4,8], index: 8, kind: input, shape index: {}]
  %s9 = inlined_call_operand.hbm [shape: bf16[3,64,64], index: 9, kind: input, shape index: {}]
  %s10 = inlined_call_operand.vmem [shape: f32[1,64], index: 10, kind: input, shape index: {}]
  %s11 = inlined_call_operand.vmem [shape: bf16[3,2,4], index: 11, kind: input, shape index: {}]
  %s12 = inlined_call_operand.hbm [shape: bf16[3,64,64], index: 12, kind: input, shape index: {}]
  %s13 = inlined_call_operand.vmem [shape: f32[1,64], index: 13, kind: input, shape index: {}]
  %s14 = inlined_call_operand.vmem [shape: f32[1,64], index: 14, kind: input, shape index: {}]
  %s15 = inlined_call_operand.<no memory space> [shape: f32[1,1], index: 15, kind: input, shape index: {}]
  %s16 = inlined_call_operand.hbm [shape: f32[2,1,128], index: 16, kind: output, shape index: {}]
  %s17 = sld [smem:[#allocation0]]
  $region137: #{tpu_custom_call.1} parent=0
    _
  %s19 = ssub.s32 1, %s17
  %s20 = scalar_select 0, %s19, %s17
  %v21 = vstv %s15
  %22 = vst [vmem:[#allocation2] sm:$0x1] %v21
  $region1: #{tpu_custom_call.1} parent=0
    #allocation3 [shape = 'u8[8192]{0}', space=vmem, size = 0x2000, scoped, tag = 'input window, operand 0, single buffered']
    #allocation4 [shape = 's32[2]{0}', space=sflag, size = 0x8, scoped, tag = 'scoped memory for tpu_custom_call.1']
    #allocation5 [shape = 's32[2]{0}', space=sflag, size = 0x8, scoped, tag = 'scoped memory for tpu_custom_call.1']
    #allocation6 [shape = 'u8[8192]{0}', space=vmem, size = 0x2000, scoped, tag = 'input window, operand 1, single buffered']
    #allocation7 [shape = 's32[1]{0}', space=sflag, size = 0x4, scoped, tag = 'scoped memory for tpu_custom_call.1']
    #allocation8 [shape = 'u8[12288]{0}', space=vmem, size = 0x3000, scoped, tag = 'input window, operand 2, single buffered']
    #allocation9 [shape = 'u8[49152]{0}', space=vmem, size = 0xc000, scoped, tag = 'input window, operand 3, single buffered']
    #allocation10 [shape = 's32[1]{0}', space=sflag, size = 0x4, scoped, tag = 'scoped memory for tpu_custom_call.1']
    #allocation11 [shape = 'u8[512]{0}', space=vmem, size = 0x400, scoped, tag = 'input window, operand 4, single buffered']
    #allocation12 [shape = 'u8[6144]{0}', space=vmem, size = 0x1800, scoped, tag = 'input window, operand 5, single buffered']
    #allocation13 [shape = 's32[1]{0}', space=sflag, size = 0x4, scoped, tag = 'scoped memory for tpu_custom_call.1']
    #allocation14 [shape = 'u8[49152]{0}', space=vmem, size = 0xc000, scoped, tag = 'input window, operand 6, single buffered']
    #allocation15 [shape = 'u8[512]{0}', space=vmem, size = 0x400, scoped, tag = 'input window, operand 7, single buffered']
    #allocation16 [shape = 's32[1]{0}', space=sflag, size = 0x4, scoped, tag = 'scoped memory for tpu_custom_call.1']
    #allocation17 [shape = 'u8[49152]{0}', space=vmem, size = 0xc000, scoped, tag = 'input window, operand 9, single buffered']
    #allocation18 [shape = 'u8[49152]{0}', space=vmem, size = 0xc000, scoped, tag = 'input window, operand 12, single buffered']
    #allocation19 [shape = 's32[1]{0}', space=sflag, size = 0x4, scoped, tag = 'scoped memory for tpu_custom_call.1']
    #allocation20 [shape = 'u8[1024]{0}', space=vmem, size = 0x400, scoped, tag = 'output window, operand 0']
    %23 = vsyncpa [#allocation4], 0
    %24 = vsyncpa [#allocation7], 0
    %25 = vsyncpa [#allocation10], 0
    %26 = vsyncpa [#allocation13], 0
    %27 = vsyncpa [#allocation16], 0
    %28 = vsyncpa [#allocation19], 0
    %29 = vsyncpa [#allocation5], 0
    %s30 = scalar_lea.sflag [#allocation5], 1
    %31 = vsyncpa %s30, 0
    loop: start=0, step=1, limit=4
    $region2: #{tpu_custom_call.1} parent=1 // loop_pre_header
      _
    $region3: #{tpu_custom_call.1} parent=1 // loop_header
      %s33 = sphi 0, %s37
      %p34 = scmp.ge.s32.totalorder %s33, 4
      %s41 = sphi 0, %s41
      %s43 = sphi 0, %s41
      %s44 = sphi 0, %s43
      %s58 = sphi 0, %s44
      %s62 = sphi 0, %s62
      %s64 = sphi 0, %s62
      %s65 = sphi 0, %s64
      %s79 = sphi 0, %s65
      %s83 = sphi 0, %s83
      %s85 = sphi 0, %s83
      %s86 = sphi 0, %s85
      %s100 = sphi 0, %s86
      %s104 = sphi 0, %s104
      %s106 = sphi 0, %s104
      %s107 = sphi 0, %s106
      %s121 = sphi 0, %s107
      %s125 = sphi 0, %s125
      %s127 = sphi 0, %s125
      %s128 = sphi 0, %s127
      %s142 = sphi 0, %s128
      %s146 = sphi 0, %s146
      %s148 = sphi 0, %s146
      %s149 = sphi 0, %s148
      %s163 = sphi 0, %s149
      %s167 = sphi 0, %s167
      %s169 = sphi 0, %s167
      %s170 = sphi 0, %s169
      %s184 = sphi 0, %s170
      %s188 = sphi 0, %s188
      %s190 = sphi 0, %s188
      %s191 = sphi 0, %s190
      %s205 = sphi 0, %s191
      %s209 = sphi 0, %s209
      %s211 = sphi 0, %s209
      %s212 = sphi 0, %s211
      %s226 = sphi 0, %s212
      %s230 = sphi 0, %s230
      %s232 = sphi 0, %s230
      %s233 = sphi 0, %s232
      %s247 = sphi 0, %s233
      %s251 = sphi 0, %s251
      %s253 = sphi 0, %s251
      %s254 = sphi 0, %s253
      %s268 = sphi 0, %s254
      %s272 = sphi 0, %s272
      %s274 = sphi 0, %s272
      %s275 = sphi 0, %s274
      %s289 = sphi 0, %s275
      %s293 = sphi 0, %s293
      %s295 = sphi 0, %s293
      %s296 = sphi 0, %s295
      %s310 = sphi 0, %s296
      %s314 = sphi 0, %s314
      %s316 = sphi 0, %s314
      %s317 = sphi 0, %s316
      %s331 = sphi 0, %s317
      %s335 = sphi 0, %s335
      %s337 = sphi 0, %s335
      %s338 = sphi 0, %s337
      %s352 = sphi 0, %s338
      %s356 = sphi 0, %s356
      %s358 = sphi 0, %s356
      %s359 = sphi 0, %s358
      %s373 = sphi 0, %s359
      %s379 = sphi 0, %s381
      %s382 = sphi 0, %s379
      %s383 = sphi 0, %s382
      %s399 = sphi 0, %s383
    $region4: #{tpu_custom_call.1} parent=1 // loop_header_branch
      %36 = sbr.rel (%p34) target = $region8
    $region5: #{tpu_custom_call.1} parent=1 // loop_body
      %s38 = ssub.s32 %s33, 1
      %s39 = ssub.s32 %s33, 2
      %s40 = sadd.s32 %s33, 1
      %s42 = sadd.s32 %s41, 1
      %p45 = scmp.eq.s32.totalorder %s33, 1
      %p46 = scmp.ne.s32.totalorder %s41, %s43
      %p47 = scmp.eq.s32.totalorder %s33, 0
      %p48 = por %p46, %p47
      %p49 = scmp.ne.s32.totalorder %s41, %s43
      %p50 = scmp.eq.s32.totalorder %s38, 1
      %p51 = por %p49, %p50
      %p52 = scmp.ne.s32.totalorder %s43, %s44
      %p53 = scmp.eq.s32.totalorder %s38, 0
      %p54 = por %p52, %p53
      %p55 = scmp.ne.s32.totalorder %s43, %s44
      %p56 = scmp.eq.s32.totalorder %s39, 1
      %p57 = por %p55, %p56
      %p59 = scmp.ne.s32.totalorder %s44, %s58
      %p60 = scmp.eq.s32.totalorder %s39, 0
      %p61 = por %p59, %p60
      %s63 = sadd.s32 %s62, 1
      %p66 = scmp.eq.s32.totalorder %s33, 1
      %p67 = scmp.ne.s32.totalorder %s62, %s64
      %p68 = scmp.eq.s32.totalorder %s33, 0
      %p69 = por %p67, %p68
      %p70 = scmp.ne.s32.totalorder %s62, %s64
      %p71 = scmp.eq.s32.totalorder %s38, 1
      %p72 = por %p70, %p71
      %p73 = scmp.ne.s32.totalorder %s64, %s65
      %p74 = scmp.eq.s32.totalorder %s38, 0
      %p75 = por %p73, %p74
      %p76 = scmp.ne.s32.totalorder %s64, %s65
      %p77 = scmp.eq.s32.totalorder %s39, 1
      %p78 = por %p76, %p77
      %p80 = scmp.ne.s32.totalorder %s65, %s79
      %p81 = scmp.eq.s32.totalorder %s39, 0
      %p82 = por %p80, %p81
      %s84 = sadd.s32 %s83, 1
      %p87 = scmp.eq.s32.totalorder %s33, 1
      %p88 = scmp.ne.s32.totalorder %s83, %s85
      %p89 = scmp.eq.s32.totalorder %s33, 0
      %p90 = por %p88, %p89
      %p91 = scmp.ne.s32.totalorder %s83, %s85
      %p92 = scmp.eq.s32.totalorder %s38, 1
      %p93 = por %p91, %p92
      %p94 = scmp.ne.s32.totalorder %s85, %s86
      %p95 = scmp.eq.s32.totalorder %s38, 0
      %p96 = por %p94, %p95
      %p97 = scmp.ne.s32.totalorder %s85, %s86
      %p98 = scmp.eq.s32.totalorder %s39, 1
      %p99 = por %p97, %p98
      %p101 = scmp.ne.s32.totalorder %s86, %s100
      %p102 = scmp.eq.s32.totalorder %s39, 0
      %p103 = por %p101, %p102
      %s105 = sadd.s32 %s104, 1
      %p108 = scmp.eq.s32.totalorder %s33, 1
      %p109 = scmp.ne.s32.totalorder %s104, %s106
      %p110 = scmp.eq.s32.totalorder %s33, 0
      %p111 = por %p109, %p110
      %p112 = scmp.ne.s32.totalorder %s104, %s106
      %p113 = scmp.eq.s32.totalorder %s38, 1
      %p114 = por %p112, %p113
      %p115 = scmp.ne.s32.totalorder %s106, %s107
      %p116 = scmp.eq.s32.totalorder %s38, 0
      %p117 = por %p115, %p116
      %p118 = scmp.ne.s32.totalorder %s106, %s107
      %p119 = scmp.eq.s32.totalorder %s39, 1
      %p120 = por %p118, %p119
      %p122 = scmp.ne.s32.totalorder %s107, %s121
      %p123 = scmp.eq.s32.totalorder %s39, 0
      %p124 = por %p122, %p123
      %s126 = sadd.s32 %s125, 1
      %p129 = scmp.eq.s32.totalorder %s33, 1
      %p130 = scmp.ne.s32.totalorder %s125, %s127
      %p131 = scmp.eq.s32.totalorder %s33, 0
      %p132 = por %p130, %p131
      %p133 = scmp.ne.s32.totalorder %s125, %s127
      %p134 = scmp.eq.s32.totalorder %s38, 1
      %p135 = por %p133, %p134
      %p136 = scmp.ne.s32.totalorder %s127, %s128
      %p137 = scmp.eq.s32.totalorder %s38, 0
      %p138 = por %p136, %p137
      %p139 = scmp.ne.s32.totalorder %s127, %s128
      %p140 = scmp.eq.s32.totalorder %s39, 1
      %p141 = por %p139, %p140
      %p143 = scmp.ne.s32.totalorder %s128, %s142
      %p144 = scmp.eq.s32.totalorder %s39, 0
      %p145 = por %p143, %p144
      %s147 = sadd.s32 %s146, 1
      %p150 = scmp.eq.s32.totalorder %s33, 1
      %p151 = scmp.ne.s32.totalorder %s146, %s148
      %p152 = scmp.eq.s32.totalorder %s33, 0
      %p153 = por %p151, %p152
      %p154 = scmp.ne.s32.totalorder %s146, %s148
      %p155 = scmp.eq.s32.totalorder %s38, 1
      %p156 = por %p154, %p155
      %p157 = scmp.ne.s32.totalorder %s148, %s149
      %p158 = scmp.eq.s32.totalorder %s38, 0
      %p159 = por %p157, %p158
      %p160 = scmp.ne.s32.totalorder %s148, %s149
      %p161 = scmp.eq.s32.totalorder %s39, 1
      %p162 = por %p160, %p161
      %p164 = scmp.ne.s32.totalorder %s149, %s163
      %p165 = scmp.eq.s32.totalorder %s39, 0
      %p166 = por %p164, %p165
      %s168 = sadd.s32 %s167, 1
      %p171 = scmp.eq.s32.totalorder %s33, 1
      %p172 = scmp.ne.s32.totalorder %s167, %s169
      %p173 = scmp.eq.s32.totalorder %s33, 0
      %p174 = por %p172, %p173
      %p175 = scmp.ne.s32.totalorder %s167, %s169
      %p176 = scmp.eq.s32.totalorder %s38, 1
      %p177 = por %p175, %p176
      %p178 = scmp.ne.s32.totalorder %s169, %s170
      %p179 = scmp.eq.s32.totalorder %s38, 0
      %p180 = por %p178, %p179
      %p181 = scmp.ne.s32.totalorder %s169, %s170
      %p182 = scmp.eq.s32.totalorder %s39, 1
      %p183 = por %p181, %p182
      %p185 = scmp.ne.s32.totalorder %s170, %s184
      %p186 = scmp.eq.s32.totalorder %s39, 0
      %p187 = por %p185, %p186
      %s189 = sadd.s32 %s188, 1
      %p192 = scmp.eq.s32.totalorder %s33, 1
      %p193 = scmp.ne.s32.totalorder %s188, %s190
      %p194 = scmp.eq.s32.totalorder %s33, 0
      %p195 = por %p193, %p194
      %p196 = scmp.ne.s32.totalorder %s188, %s190
      %p197 = scmp.eq.s32.totalorder %s38, 1
      %p198 = por %p196, %p197
      %p199 = scmp.ne.s32.totalorder %s190, %s191
      %p200 = scmp.eq.s32.totalorder %s38, 0
      %p201 = por %p199, %p200
      %p202 = scmp.ne.s32.totalorder %s190, %s191
      %p203 = scmp.eq.s32.totalorder %s39, 1
      %p204 = por %p202, %p203
      %p206 = scmp.ne.s32.totalorder %s191, %s205
      %p207 = scmp.eq.s32.totalorder %s39, 0
      %p208 = por %p206, %p207
      %s210 = sadd.s32 %s209, 1
      %p213 = scmp.eq.s32.totalorder %s33, 1
      %p214 = scmp.ne.s32.totalorder %s209, %s211
      %p215 = scmp.eq.s32.totalorder %s33, 0
      %p216 = por %p214, %p215
      %p217 = scmp.ne.s32.totalorder %s209, %s211
      %p218 = scmp.eq.s32.totalorder %s38, 1
      %p219 = por %p217, %p218
      %p220 = scmp.ne.s32.totalorder %s211, %s212
      %p221 = scmp.eq.s32.totalorder %s38, 0
      %p222 = por %p220, %p221
      %p223 = scmp.ne.s32.totalorder %s211, %s212
      %p224 = scmp.eq.s32.totalorder %s39, 1
      %p225 = por %p223, %p224
      %p227 = scmp.ne.s32.totalorder %s212, %s226
      %p228 = scmp.eq.s32.totalorder %s39, 0
      %p229 = por %p227, %p228
      %s231 = sadd.s32 %s230, 1
      %p234 = scmp.eq.s32.totalorder %s33, 1
      %p235 = scmp.ne.s32.totalorder %s230, %s232
      %p236 = scmp.eq.s32.totalorder %s33, 0
      %p237 = por %p235, %p236
      %p238 = scmp.ne.s32.totalorder %s230, %s232
      %p239 = scmp.eq.s32.totalorder %s38, 1
      %p240 = por %p238, %p239
      %p241 = scmp.ne.s32.totalorder %s232, %s233
      %p242 = scmp.eq.s32.totalorder %s38, 0
      %p243 = por %p241, %p242
      %p244 = scmp.ne.s32.totalorder %s232, %s233
      %p245 = scmp.eq.s32.totalorder %s39, 1
      %p246 = por %p244, %p245
      %p248 = scmp.ne.s32.totalorder %s233, %s247
      %p249 = scmp.eq.s32.totalorder %s39, 0
      %p250 = por %p248, %p249
      %s252 = sadd.s32 %s251, 1
      %p255 = scmp.eq.s32.totalorder %s33, 1
      %p256 = scmp.ne.s32.totalorder %s251, %s253
      %p257 = scmp.eq.s32.totalorder %s33, 0
      %p258 = por %p256, %p257
      %p259 = scmp.ne.s32.totalorder %s251, %s253
      %p260 = scmp.eq.s32.totalorder %s38, 1
      %p261 = por %p259, %p260
      %p262 = scmp.ne.s32.totalorder %s253, %s254
      %p263 = scmp.eq.s32.totalorder %s38, 0
      %p264 = por %p262, %p263
      %p265 = scmp.ne.s32.totalorder %s253, %s254
      %p266 = scmp.eq.s32.totalorder %s39, 1
      %p267 = por %p265, %p266
      %p269 = scmp.ne.s32.totalorder %s254, %s268
      %p270 = scmp.eq.s32.totalorder %s39, 0
      %p271 = por %p269, %p270
      %s273 = sadd.s32 %s272, 1
      %p276 = scmp.eq.s32.totalorder %s33, 1
      %p277 = scmp.ne.s32.totalorder %s272, %s274
      %p278 = scmp.eq.s32.totalorder %s33, 0
      %p279 = por %p277, %p278
      %p280 = scmp.ne.s32.totalorder %s272, %s274
      %p281 = scmp.eq.s32.totalorder %s38, 1
      %p282 = por %p280, %p281
      %p283 = scmp.ne.s32.totalorder %s274, %s275
      %p284 = scmp.eq.s32.totalorder %s38, 0
      %p285 = por %p283, %p284
      %p286 = scmp.ne.s32.totalorder %s274, %s275
      %p287 = scmp.eq.s32.totalorder %s39, 1
      %p288 = por %p286, %p287
      %p290 = scmp.ne.s32.totalorder %s275, %s289
      %p291 = scmp.eq.s32.totalorder %s39, 0
      %p292 = por %p290, %p291
      %s294 = sadd.s32 %s293, 1
      %p297 = scmp.eq.s32.totalorder %s33, 1
      %p298 = scmp.ne.s32.totalorder %s293, %s295
      %p299 = scmp.eq.s32.totalorder %s33, 0
      %p300 = por %p298, %p299
      %p301 = scmp.ne.s32.totalorder %s293, %s295
      %p302 = scmp.eq.s32.totalorder %s38, 1
      %p303 = por %p301, %p302
      %p304 = scmp.ne.s32.totalorder %s295, %s296
      %p305 = scmp.eq.s32.totalorder %s38, 0
      %p306 = por %p304, %p305
      %p307 = scmp.ne.s32.totalorder %s295, %s296
      %p308 = scmp.eq.s32.totalorder %s39, 1
      %p309 = por %p307, %p308
      %p311 = scmp.ne.s32.totalorder %s296, %s310
      %p312 = scmp.eq.s32.totalorder %s39, 0
      %p313 = por %p311, %p312
      %s315 = sadd.s32 %s314, 1
      %p318 = scmp.eq.s32.totalorder %s33, 1
      %p319 = scmp.ne.s32.totalorder %s314, %s316
      %p320 = scmp.eq.s32.totalorder %s33, 0
      %p321 = por %p319, %p320
      %p322 = scmp.ne.s32.totalorder %s314, %s316
      %p323 = scmp.eq.s32.totalorder %s38, 1
      %p324 = por %p322, %p323
      %p325 = scmp.ne.s32.totalorder %s316, %s317
      %p326 = scmp.eq.s32.totalorder %s38, 0
      %p327 = por %p325, %p326
      %p328 = scmp.ne.s32.totalorder %s316, %s317
      %p329 = scmp.eq.s32.totalorder %s39, 1
      %p330 = por %p328, %p329
      %p332 = scmp.ne.s32.totalorder %s317, %s331
      %p333 = scmp.eq.s32.totalorder %s39, 0
      %p334 = por %p332, %p333
      %s336 = sadd.s32 %s335, 1
      %p339 = scmp.eq.s32.totalorder %s33, 1
      %p340 = scmp.ne.s32.totalorder %s335, %s337
      %p341 = scmp.eq.s32.totalorder %s33, 0
      %p342 = por %p340, %p341
      %p343 = scmp.ne.s32.totalorder %s335, %s337
      %p344 = scmp.eq.s32.totalorder %s38, 1
      %p345 = por %p343, %p344
      %p346 = scmp.ne.s32.totalorder %s337, %s338
      %p347 = scmp.eq.s32.totalorder %s38, 0
      %p348 = por %p346, %p347
      %p349 = scmp.ne.s32.totalorder %s337, %s338
      %p350 = scmp.eq.s32.totalorder %s39, 1
      %p351 = por %p349, %p350
      %p353 = scmp.ne.s32.totalorder %s338, %s352
      %p354 = scmp.eq.s32.totalorder %s39, 0
      %p355 = por %p353, %p354
      %s357 = sadd.s32 %s356, 1
      %p360 = scmp.eq.s32.totalorder %s33, 1
      %p361 = scmp.ne.s32.totalorder %s356, %s358
      %p362 = scmp.eq.s32.totalorder %s33, 0
      %p363 = por %p361, %p362
      %p364 = scmp.ne.s32.totalorder %s356, %s358
      %p365 = scmp.eq.s32.totalorder %s38, 1
      %p366 = por %p364, %p365
      %p367 = scmp.ne.s32.totalorder %s358, %s359
      %p368 = scmp.eq.s32.totalorder %s38, 0
      %p369 = por %p367, %p368
      %p370 = scmp.ne.s32.totalorder %s358, %s359
      %p371 = scmp.eq.s32.totalorder %s39, 1
      %p372 = por %p370, %p371
      %p374 = scmp.ne.s32.totalorder %s359, %s373
      %p375 = scmp.eq.s32.totalorder %s39, 0
      %p376 = por %p374, %p375
      %s377 = ssub.s32 %s33, %s40
      %p378 = scmp.eq.s32.totalorder %s377, 0
      %s380 = sadd.s32 %s379, 1
      %s381 = scalar_select %p378, %s379, %s380
      %p384 = pneg %p378
      %p385 = scmp.eq.s32.totalorder %s33, 1
      %p386 = por %p384, %p385
      %p387 = scmp.ne.s32.totalorder %s379, %s382
      %p388 = scmp.eq.s32.totalorder %s33, 0
      %p389 = por %p387, %p388
      %p390 = scmp.ne.s32.totalorder %s379, %s382
      %p391 = scmp.eq.s32.totalorder %s38, 1
      %p392 = por %p390, %p391
      %p393 = scmp.ne.s32.totalorder %s382, %s383
      %p394 = scmp.eq.s32.totalorder %s38, 0
      %p395 = por %p393, %p394
      %p396 = scmp.ne.s32.totalorder %s382, %s383
      %p397 = scmp.eq.s32.totalorder %s39, 1
      %p398 = por %p396, %p397
      %p400 = scmp.ne.s32.totalorder %s383, %s399
      %p401 = scmp.eq.s32.totalorder %s39, 0
      %p402 = por %p400, %p401
      %p403 = scmp.le.s32.totalorder 1, %s33
      %p404 = scmp.lt.s32.totalorder %s33, 3
      %p405 = pnand %p403, %p404
      %p406 = pneg %p405
      // Predicated region
      $region9: #{tpu_custom_call.1} parent=5 // pred_check
        _
      $region10: #{tpu_custom_call.1} parent=5 // pred_check_branch
        %408 = sbr.rel (%p405) target = $region12
      $region11: #{tpu_custom_call.1} parent=5 // pred_region
        %s409 = ssub.s32 %s33, 1
        // Predicated region
        $region13: #{tpu_custom_call.1} parent=11 // pred_check
          %p410 = pneg %p54
        $region14: #{tpu_custom_call.1} parent=11 // pred_check_branch
          %412 = sbr.rel (%p410) target = $region16
        $region15: #{tpu_custom_call.1} parent=11 // pred_region
          %414 = vsyncadd [#allocation4], 0
          %s415 = sshll.u32 %s0, 4
          %s416 = int_to_ptr.hbm [resolvable:$true] %s415
          %s417 = sshll.u32 [#allocation3], 4
          %s418 = int_to_ptr.vmem [resolvable:$true] %s417
          %423 = dma.hbm_to_vmem [thread:$0]  %s416, 256, %s418, [#allocation4], 64, 64, 4
        $region16: #{tpu_custom_call.1} parent=11 // pred_fallthru
          _
        // Predicated region
        $region17: #{tpu_custom_call.1} parent=11 // pred_check
          %p424 = pneg %p75
        $region18: #{tpu_custom_call.1} parent=11 // pred_check_branch
          %426 = sbr.rel (%p424) target = $region20
        $region19: #{tpu_custom_call.1} parent=11 // pred_region
          %428 = vsyncadd [#allocation7], 0
          %s429 = sshll.u32 %s1, 4
          %s430 = int_to_ptr.hbm [resolvable:$true] %s429
          %s431 = sshll.u32 [#allocation6], 4
          %s432 = int_to_ptr.vmem [resolvable:$true] %s431
          %437 = dma.hbm_to_vmem [thread:$0]  %s430, 256, %s432, [#allocation7], 64, 64, 4
        $region20: #{tpu_custom_call.1} parent=11 // pred_fallthru
          _
        // Predicated region
        $region21: #{tpu_custom_call.1} parent=11 // pred_check
          %p438 = pneg %p96
        $region22: #{tpu_custom_call.1} parent=11 // pred_check_branch
          %440 = sbr.rel (%p438) target = $region24
        $region23: #{tpu_custom_call.1} parent=11 // pred_region
          %442 = vsyncadd [#allocation7], 0
          %s443 = sshll.u32 %s2, 4
          %s444 = int_to_ptr.hbm [resolvable:$true] %s443
          %s445 = sshll.u32 [#allocation8], 4
          %s446 = int_to_ptr.vmem [resolvable:$true] %s445
          %451 = dma.hbm_to_vmem [thread:$0]  %s444, 384, %s446, [#allocation7], 64, 64, 4
        $region24: #{tpu_custom_call.1} parent=11 // pred_fallthru
          _
        // Predicated region
        $region25: #{tpu_custom_call.1} parent=11 // pred_check
          %p452 = pneg %p117
        $region26: #{tpu_custom_call.1} parent=11 // pred_check_branch
          %454 = sbr.rel (%p452) target = $region28
        $region27: #{tpu_custom_call.1} parent=11 // pred_region
          %456 = vsyncadd [#allocation10], 0
          %s457 = sshll.u32 %s3, 4
          %s458 = int_to_ptr.hbm [resolvable:$true] %s457
          %s459 = sshll.u32 [#allocation9], 4
          %s460 = int_to_ptr.vmem [resolvable:$true] %s459
          %465 = dma.hbm_to_vmem [thread:$0]  %s458, 1536, %s460, [#allocation10], 64, 64, 4
        $region28: #{tpu_custom_call.1} parent=11 // pred_fallthru
          _
        // Predicated region
        $region29: #{tpu_custom_call.1} parent=11 // pred_check
          %p466 = pneg %p138
        $region30: #{tpu_custom_call.1} parent=11 // pred_check_branch
          %468 = sbr.rel (%p466) target = $region32
        $region31: #{tpu_custom_call.1} parent=11 // pred_region
          %470 = vsyncadd [#allocation10], 0
          %s472 = sshll.u32 %s4, 4
          %s473 = int_to_ptr.hbm [resolvable:$true] %s472
          %s474 = sshll.u32 [#allocation11], 4
          %s475 = int_to_ptr.vmem [resolvable:$true] %s474
          %477 = dma.hbm_to_vmem [thread:$0]  %s473, 16, %s475, [#allocation10]
        $region32: #{tpu_custom_call.1} parent=11 // pred_fallthru
          _
        // Predicated region
        $region33: #{tpu_custom_call.1} parent=11 // pred_check
          %p478 = pneg %p159
        $region34: #{tpu_custom_call.1} parent=11 // pred_check_branch
          %480 = sbr.rel (%p478) target = $region36
        $region35: #{tpu_custom_call.1} parent=11 // pred_region
          %482 = vsyncadd [#allocation13], 0
          %s483 = sshll.u32 %s5, 4
          %s484 = int_to_ptr.hbm [resolvable:$true] %s483
          %s485 = sshll.u32 [#allocation12], 4
          %s486 = int_to_ptr.vmem [resolvable:$true] %s485
          %491 = dma.hbm_to_vmem [thread:$0]  %s484, 192, %s486, [#allocation13], 64, 64, 4
        $region36: #{tpu_custom_call.1} parent=11 // pred_fallthru
          _
        // Predicated region
        $region37: #{tpu_custom_call.1} parent=11 // pred_check
          %p492 = pneg %p180
        $region38: #{tpu_custom_call.1} parent=11 // pred_check_branch
          %494 = sbr.rel (%p492) target = $region40
        $region39: #{tpu_custom_call.1} parent=11 // pred_region
          %496 = vsyncadd [#allocation13], 0
          %s497 = sshll.u32 %s6, 4
          %s498 = int_to_ptr.hbm [resolvable:$true] %s497
          %s499 = sshll.u32 [#allocation14], 4
          %s500 = int_to_ptr.vmem [resolvable:$true] %s499
          %505 = dma.hbm_to_vmem [thread:$0]  %s498, 1536, %s500, [#allocation13], 64, 64, 4
        $region40: #{tpu_custom_call.1} parent=11 // pred_fallthru
          _
        // Predicated region
        $region41: #{tpu_custom_call.1} parent=11 // pred_check
          %p506 = pneg %p201
        $region42: #{tpu_custom_call.1} parent=11 // pred_check_branch
          %508 = sbr.rel (%p506) target = $region44
        $region43: #{tpu_custom_call.1} parent=11 // pred_region
          %510 = vsyncadd [#allocation16], 0
          %s512 = sshll.u32 %s7, 4
          %s513 = int_to_ptr.hbm [resolvable:$true] %s512
          %s514 = sshll.u32 [#allocation15], 4
          %s515 = int_to_ptr.vmem [resolvable:$true] %s514
          %517 = dma.hbm_to_vmem [thread:$0]  %s513, 16, %s515, [#allocation16]
        $region44: #{tpu_custom_call.1} parent=11 // pred_fallthru
          _
        // Predicated region
        $region45: #{tpu_custom_call.1} parent=11 // pred_check
          %p518 = pneg %p222
        $region46: #{tpu_custom_call.1} parent=11 // pred_check_branch
          %520 = sbr.rel (%p518) target = $region48
        $region47: #{tpu_custom_call.1} parent=11 // pred_region
          _
        $region48: #{tpu_custom_call.1} parent=11 // pred_fallthru
          _
        // Predicated region
        $region49: #{tpu_custom_call.1} parent=11 // pred_check
          %p521 = pneg %p243
        $region50: #{tpu_custom_call.1} parent=11 // pred_check_branch
          %523 = sbr.rel (%p521) target = $region52
        $region51: #{tpu_custom_call.1} parent=11 // pred_region
          %525 = vsyncadd [#allocation16], 0
          %s526 = sshll.u32 %s9, 4
          %s527 = int_to_ptr.hbm [resolvable:$true] %s526
          %s528 = sshll.u32 [#allocation17], 4
          %s529 = int_to_ptr.vmem [resolvable:$true] %s528
          %534 = dma.hbm_to_vmem [thread:$0]  %s527, 1536, %s529, [#allocation16], 64, 64, 4
        $region52: #{tpu_custom_call.1} parent=11 // pred_fallthru
          _
        // Predicated region
        $region53: #{tpu_custom_call.1} parent=11 // pred_check
          %p535 = pneg %p264
        $region54: #{tpu_custom_call.1} parent=11 // pred_check_branch
          %537 = sbr.rel (%p535) target = $region56
        $region55: #{tpu_custom_call.1} parent=11 // pred_region
          _
        $region56: #{tpu_custom_call.1} parent=11 // pred_fallthru
          _
        // Predicated region
        $region57: #{tpu_custom_call.1} parent=11 // pred_check
          %p538 = pneg %p285
        $region58: #{tpu_custom_call.1} parent=11 // pred_check_branch
          %540 = sbr.rel (%p538) target = $region60
        $region59: #{tpu_custom_call.1} parent=11 // pred_region
          _
        $region60: #{tpu_custom_call.1} parent=11 // pred_fallthru
          _
        // Predicated region
        $region61: #{tpu_custom_call.1} parent=11 // pred_check
          %p541 = pneg %p306
        $region62: #{tpu_custom_call.1} parent=11 // pred_check_branch
          %543 = sbr.rel (%p541) target = $region64
        $region63: #{tpu_custom_call.1} parent=11 // pred_region
          %545 = vsyncadd [#allocation19], 0
          %s546 = sshll.u32 %s12, 4
          %s547 = int_to_ptr.hbm [resolvable:$true] %s546
          %s548 = sshll.u32 [#allocation18], 4
          %s549 = int_to_ptr.vmem [resolvable:$true] %s548
          %554 = dma.hbm_to_vmem [thread:$0]  %s547, 1536, %s549, [#allocation19], 64, 64, 4
        $region64: #{tpu_custom_call.1} parent=11 // pred_fallthru
          _
        // Predicated region
        $region65: #{tpu_custom_call.1} parent=11 // pred_check
          %p555 = pneg %p327
        $region66: #{tpu_custom_call.1} parent=11 // pred_check_branch
          %557 = sbr.rel (%p555) target = $region68
        $region67: #{tpu_custom_call.1} parent=11 // pred_region
          _
        $region68: #{tpu_custom_call.1} parent=11 // pred_fallthru
          _
        // Predicated region
        $region69: #{tpu_custom_call.1} parent=11 // pred_check
          %p558 = pneg %p348
        $region70: #{tpu_custom_call.1} parent=11 // pred_check_branch
          %560 = sbr.rel (%p558) target = $region72
        $region71: #{tpu_custom_call.1} parent=11 // pred_region
          _
        $region72: #{tpu_custom_call.1} parent=11 // pred_fallthru
          _
        // Predicated region
        $region73: #{tpu_custom_call.1} parent=11 // pred_check
          %p561 = pneg %p369
        $region74: #{tpu_custom_call.1} parent=11 // pred_check_branch
          %563 = sbr.rel (%p561) target = $region76
        $region75: #{tpu_custom_call.1} parent=11 // pred_region
          _
        $region76: #{tpu_custom_call.1} parent=11 // pred_fallthru
          _
      $region12: #{tpu_custom_call.1} parent=5 // pred_fallthru
        _
      %p564 = scmp.lt.s32.totalorder %s33, 2
      // Predicated region
      $region77: #{tpu_custom_call.1} parent=5 // pred_check
        %p565 = pneg %p564
      $region78: #{tpu_custom_call.1} parent=5 // pred_check_branch
        %567 = sbr.rel (%p565) target = $region80
      $region79: #{tpu_custom_call.1} parent=5 // pred_region
        _
      $region80: #{tpu_custom_call.1} parent=5 // pred_fallthru
        _
      %p568 = scmp.le.s32.totalorder 1, %s33
      %p569 = scmp.lt.s32.totalorder %s33, 3
      %p570 = pnand %p568, %p569
      %p571 = pneg %p570
      // Predicated region
      $region81: #{tpu_custom_call.1} parent=5 // pred_check
        _
      $region82: #{tpu_custom_call.1} parent=5 // pred_check_branch
        %573 = sbr.rel (%p570) target = $region84
      $region83: #{tpu_custom_call.1} parent=5 // pred_region
        %s574 = ssub.s32 %s33, 1
        // Predicated region
        $region85: #{tpu_custom_call.1} parent=83 // pred_check
          %p575 = pneg %p54
        $region86: #{tpu_custom_call.1} parent=83 // pred_check_branch
          %577 = sbr.rel (%p575) target = $region88
        $region87: #{tpu_custom_call.1} parent=83 // pred_region
          %579 = dma.done [#allocation4], 256
        $region88: #{tpu_custom_call.1} parent=83 // pred_fallthru
          _
        // Predicated region
        $region89: #{tpu_custom_call.1} parent=83 // pred_check
          %p580 = pneg %p75
        $region90: #{tpu_custom_call.1} parent=83 // pred_check_branch
          %582 = sbr.rel (%p580) target = $region92
        $region91: #{tpu_custom_call.1} parent=83 // pred_region
          %584 = dma.done [#allocation7], 256
        $region92: #{tpu_custom_call.1} parent=83 // pred_fallthru
          _
        // Predicated region
        $region93: #{tpu_custom_call.1} parent=83 // pred_check
          %p585 = pneg %p96
        $region94: #{tpu_custom_call.1} parent=83 // pred_check_branch
          %587 = sbr.rel (%p585) target = $region96
        $region95: #{tpu_custom_call.1} parent=83 // pred_region
          %589 = dma.done [#allocation7], 384
        $region96: #{tpu_custom_call.1} parent=83 // pred_fallthru
          _
        // Predicated region
        $region97: #{tpu_custom_call.1} parent=83 // pred_check
          %p590 = pneg %p117
        $region98: #{tpu_custom_call.1} parent=83 // pred_check_branch
          %592 = sbr.rel (%p590) target = $region100
        $region99: #{tpu_custom_call.1} parent=83 // pred_region
          %594 = dma.done [#allocation10], 1536
        $region100: #{tpu_custom_call.1} parent=83 // pred_fallthru
          _
        // Predicated region
        $region101: #{tpu_custom_call.1} parent=83 // pred_check
          %p595 = pneg %p138
        $region102: #{tpu_custom_call.1} parent=83 // pred_check_branch
          %597 = sbr.rel (%p595) target = $region104
        $region103: #{tpu_custom_call.1} parent=83 // pred_region
          %599 = dma.done [#allocation10], 16
        $region104: #{tpu_custom_call.1} parent=83 // pred_fallthru
          _
        // Predicated region
        $region105: #{tpu_custom_call.1} parent=83 // pred_check
          %p600 = pneg %p159
        $region106: #{tpu_custom_call.1} parent=83 // pred_check_branch
          %602 = sbr.rel (%p600) target = $region108
        $region107: #{tpu_custom_call.1} parent=83 // pred_region
          %604 = dma.done [#allocation13], 192
        $region108: #{tpu_custom_call.1} parent=83 // pred_fallthru
          _
        // Predicated region
        $region109: #{tpu_custom_call.1} parent=83 // pred_check
          %p605 = pneg %p180
        $region110: #{tpu_custom_call.1} parent=83 // pred_check_branch
          %607 = sbr.rel (%p605) target = $region112
        $region111: #{tpu_custom_call.1} parent=83 // pred_region
          %609 = dma.done [#allocation13], 1536
        $region112: #{tpu_custom_call.1} parent=83 // pred_fallthru
          _
        // Predicated region
        $region113: #{tpu_custom_call.1} parent=83 // pred_check
          %p610 = pneg %p201
        $region114: #{tpu_custom_call.1} parent=83 // pred_check_branch
          %612 = sbr.rel (%p610) target = $region116
        $region115: #{tpu_custom_call.1} parent=83 // pred_region
          %614 = dma.done [#allocation16], 16
        $region116: #{tpu_custom_call.1} parent=83 // pred_fallthru
          _
        // Predicated region
        $region117: #{tpu_custom_call.1} parent=83 // pred_check
          %p615 = pneg %p243
        $region118: #{tpu_custom_call.1} parent=83 // pred_check_branch
          %617 = sbr.rel (%p615) target = $region120
        $region119: #{tpu_custom_call.1} parent=83 // pred_region
          %619 = dma.done [#allocation16], 1536
        $region120: #{tpu_custom_call.1} parent=83 // pred_fallthru
          _
        // Predicated region
        $region121: #{tpu_custom_call.1} parent=83 // pred_check
          %p620 = pneg %p306
        $region122: #{tpu_custom_call.1} parent=83 // pred_check_branch
          %622 = sbr.rel (%p620) target = $region124
        $region123: #{tpu_custom_call.1} parent=83 // pred_region
          %624 = dma.done [#allocation19], 1536
        $region124: #{tpu_custom_call.1} parent=83 // pred_fallthru
          _
        %p625 = pneg %p54
        %p626 = pneg %p51
        %p627 = pneg %p75
        %p628 = pneg %p72
        %p629 = pneg %p96
        %p630 = pneg %p93
        %p631 = pneg %p117
        %p632 = pneg %p114
        %p633 = pneg %p138
        %p634 = pneg %p135
        %p635 = pneg %p159
        %p636 = pneg %p156
        %p637 = pneg %p180
        %p638 = pneg %p177
        %p639 = pneg %p201
        %p640 = pneg %p198
        %p641 = pneg %p222
        %p642 = pneg %p219
        %p643 = pneg %p243
        %p644 = pneg %p240
        %p645 = pneg %p264
        %p646 = pneg %p261
        %p647 = pneg %p285
        %p648 = pneg %p282
        %p649 = pneg %p306
        %p650 = pneg %p303
        %p651 = pneg %p327
        %p652 = pneg %p324
        %p653 = pneg %p348
        %p654 = pneg %p345
        %p655 = pneg %p369
        %p656 = pneg %p366
        %p657 = pneg %p395
        %p658 = pneg %p392
        %s659 = sand.u32 %s382, 1
        %s660 = scalar_lea.sflag [#allocation5], %s659
        %s661 = sand.u32 %s382, 1
        %s662 = scalar_lea.vmem [#allocation20], %s661
        %p664 = scmp.eq.s32.totalorder %s38, 0
        %v665 = vld [vmem:[#allocation3] sm:$0xf]
        %v666 = vld [vmem:[#allocation3 + $0x4] sm:$0xf]
        %v667 = vld [vmem:[#allocation3 + $0x8] sm:$0xf]
        %v668 = vld [vmem:[#allocation3 + $0xc] sm:$0xf]
        %v669 = vld [vmem:[#allocation6] sm:$0xf]
        %v670 = vld [vmem:[#allocation6 + $0x4] sm:$0xf]
        %v671 = vld [vmem:[#allocation6 + $0x8] sm:$0xf]
        %v672 = vld [vmem:[#allocation6 + $0xc] sm:$0xf]
        %s673 = scalar_select %p664, 1, 0
        %v674 = vstv %s673
        %vm675 = vcmp.eq.s32.totalorder %v674, 1
        %v676 = vsel %vm675, %v665, %v669
        %v677 = vsel %vm675, %v666, %v670
        %v678 = vsel %vm675, %v667, %v671
        %v679 = vsel %vm675, %v668, %v672
        %s680 = scalar_select %p664, 1.0, 0.0
        %v681 = vld [vmem:[#allocation11] sm:$0x1]
        %v682 = vld [vmem:[#allocation8] sm:$0xf]
        %v683 = vld [vmem:[#allocation8 + $0x4] sm:$0xf]
        %v686 = vunpack.c.l.b16 %v682
        %v687 = vunpack.c.l.b16 %v683
        %v688 = vpack.c.b16 %v687, %v686
        %v693 = vunpack.c.l.b16 %v676
        %v694 = vunpack.c.l.b16 %v677
        %v695 = vunpack.c.l.b16 %v678
        %v696 = vunpack.c.l.b16 %v679
        %v697 = vpack.c.b16 %v694, %v693
        %v698 = vpack.c.b16 %v696, %v695
        %vm701 = vcmask 261120
        %v703 = vsel %vm701, %v688, 0
        %705 = vmatpush.bf16.msra.mxu0 0
        %706 = vmatpush.bf16.msra.mxu0 0
        %707 = vmatpush.bf16.msra.mxu0 0
        %708 = vmatpush.bf16.msra.mxu0 0
        %709 = vmatpush.bf16.msra.mxu0 0
        %710 = vmatpush.bf16.msra.mxu0 0
        %711 = vmatpush.bf16.msra.mxu0 %v698
        %712 = vmatpush.bf16.msra.mxu0 %v697
        %713 = vmatmul.bf16.gmra.mxu0 %v703
        %v714 = vpop.f32.mrf.mxu0
        %v715 = vadd.f32 0.0, %v714
        %v716 = vpop.f32.mrf.mxu0
        %v717 = vadd.f32 0.0, %v716
        %718 = vdwg.mxu0
        %v719 = vpack.c.bf16 %v717, %v715
        %v720 = vld [vmem:[#allocation9] sm:$0xf]
        %v721 = vld [vmem:[#allocation9 + $0x4] sm:$0xf]
        %v722 = vld [vmem:[#allocation9 + $0x8] sm:$0xf]
        %v723 = vld [vmem:[#allocation9 + $0xc] sm:$0xf]
        %v724 = vld [vmem:[#allocation9 + $0x10] sm:$0xf]
        %v725 = vld [vmem:[#allocation9 + $0x14] sm:$0xf]
        %v726 = vld [vmem:[#allocation9 + $0x18] sm:$0xf]
        %v727 = vld [vmem:[#allocation9 + $0x1c] sm:$0xf]
        %v736 = vunpack.c.l.b16 %v720
        %v737 = vunpack.c.l.b16 %v721
        %v738 = vunpack.c.l.b16 %v722
        %v739 = vunpack.c.l.b16 %v723
        %v740 = vunpack.c.l.b16 %v724
        %v741 = vunpack.c.l.b16 %v725
        %v742 = vunpack.c.l.b16 %v726
        %v743 = vunpack.c.l.b16 %v727
        %v744 = vpack.c.b16 %v737, %v736
        %v745 = vpack.c.b16 %v739, %v738
        %v746 = vpack.c.b16 %v741, %v740
        %v747 = vpack.c.b16 %v743, %v742
        %vm752 = vcmask 523264
        %v754 = vsel %vm752, %v719, 0
        %756 = vmatpush.bf16.msra.mxu0 0
        %757 = vmatpush.bf16.msra.mxu0 0
        %758 = vmatpush.bf16.msra.mxu0 0
        %759 = vmatpush.bf16.msra.mxu0 0
        %760 = vmatpush.bf16.msra.mxu0 %v747
        %761 = vmatpush.bf16.msra.mxu0 %v746
        %762 = vmatpush.bf16.msra.mxu0 %v745
        %763 = vmatpush.bf16.msra.mxu0 %v744
        %764 = vmatmul.bf16.gmra.mxu0 %v754
        %v765 = vpop.f32.mrf.mxu0
        %v766 = vadd.f32 0.0, %v765
        %v767 = vpop.f32.mrf.mxu0
        %v768 = vadd.f32 0.0, %v767
        %769 = vdwg.mxu0
        %v771 = vperm.slane %v681, 0
        %v773 = vadd.f32 %v771, %v766
        %v774 = vadd.f32 %v771, %v768
        %s775 = scalar_lea.vmem [#allocation8], 8
        %v776 = vld [vmem:[%s775] sm:$0xf]
        %v777 = vld [vmem:[%s775 + $0x4] sm:$0xf]
        %v780 = vunpack.c.l.b16 %v776
        %v781 = vunpack.c.l.b16 %v777
        %v782 = vpack.c.b16 %v781, %v780
        %v784 = vsel %vm701, %v782, 0
        %786 = vmatpush.bf16.msra.mxu0 0
        %787 = vmatpush.bf16.msra.mxu0 0
        %788 = vmatpush.bf16.msra.mxu0 0
        %789 = vmatpush.bf16.msra.mxu0 0
        %790 = vmatpush.bf16.msra.mxu0 0
        %791 = vmatpush.bf16.msra.mxu0 0
        %792 = vmatpush.bf16.msra.mxu0 %v698
        %793 = vmatpush.bf16.msra.mxu0 %v697
        %794 = vmatmul.bf16.gmra.mxu0 %v784
        %v795 = vpop.f32.mrf.mxu0
        %v796 = vadd.f32 0.0, %v795
        %v797 = vpop.f32.mrf.mxu0
        %v798 = vadd.f32 0.0, %v797
        %799 = vdwg.mxu0
        %v800 = vpack.c.bf16 %v798, %v796
        %s801 = scalar_lea.vmem [#allocation9], 32
        %v802 = vld [vmem:[%s801] sm:$0xf]
        %v803 = vld [vmem:[%s801 + $0x4] sm:$0xf]
        %v804 = vld [vmem:[%s801 + $0x8] sm:$0xf]
        %v805 = vld [vmem:[%s801 + $0xc] sm:$0xf]
        %v806 = vld [vmem:[%s801 + $0x10] sm:$0xf]
        %v807 = vld [vmem:[%s801 + $0x14] sm:$0xf]
        %v808 = vld [vmem:[%s801 + $0x18] sm:$0xf]
        %v809 = vld [vmem:[%s801 + $0x1c] sm:$0xf]
        %v818 = vunpack.c.l.b16 %v802
        %v819 = vunpack.c.l.b16 %v803
        %v820 = vunpack.c.l.b16 %v804
        %v821 = vunpack.c.l.b16 %v805
        %v822 = vunpack.c.l.b16 %v806
        %v823 = vunpack.c.l.b16 %v807
        %v824 = vunpack.c.l.b16 %v808
        %v825 = vunpack.c.l.b16 %v809
        %v826 = vpack.c.b16 %v819, %v818
        %v827 = vpack.c.b16 %v821, %v820
        %v828 = vpack.c.b16 %v823, %v822
        %v829 = vpack.c.b16 %v825, %v824
        %v835 = vsel %vm752, %v800, 0
        %837 = vmatpush.bf16.msra.mxu0 0
        %838 = vmatpush.bf16.msra.mxu0 0
        %839 = vmatpush.bf16.msra.mxu0 0
        %840 = vmatpush.bf16.msra.mxu0 0
        %841 = vmatpush.bf16.msra.mxu0 %v829
        %842 = vmatpush.bf16.msra.mxu0 %v828
        %843 = vmatpush.bf16.msra.mxu0 %v827
        %844 = vmatpush.bf16.msra.mxu0 %v826
        %845 = vmatmul.bf16.gmra.mxu0 %v835
        %v846 = vpop.f32.mrf.mxu0
        %v847 = vadd.f32 0.0, %v846
        %v848 = vpop.f32.mrf.mxu0
        %v849 = vadd.f32 0.0, %v848
        %850 = vdwg.mxu0
        %v851 = vadd.f32 %v773, %v847
        %v852 = vadd.f32 %v774, %v849
        %s853 = scalar_lea.vmem [#allocation8], 16
        %v854 = vld [vmem:[%s853] sm:$0xf]
        %v855 = vld [vmem:[%s853 + $0x4] sm:$0xf]
        %v858 = vunpack.c.l.b16 %v854
        %v859 = vunpack.c.l.b16 %v855
        %v860 = vpack.c.b16 %v859, %v858
        %v862 = vsel %vm701, %v860, 0
        %864 = vmatpush.bf16.msra.mxu0 0
        %865 = vmatpush.bf16.msra.mxu0 0
        %866 = vmatpush.bf16.msra.mxu0 0
        %867 = vmatpush.bf16.msra.mxu0 0
        %868 = vmatpush.bf16.msra.mxu0 0
        %869 = vmatpush.bf16.msra.mxu0 0
        %870 = vmatpush.bf16.msra.mxu0 %v698
        %871 = vmatpush.bf16.msra.mxu0 %v697
        %872 = vmatmul.bf16.gmra.mxu0 %v862
        %v873 = vpop.f32.mrf.mxu0
        %v874 = vadd.f32 0.0, %v873
        %v875 = vpop.f32.mrf.mxu0
        %v876 = vadd.f32 0.0, %v875
        %877 = vdwg.mxu0
        %v878 = vpack.c.bf16 %v876, %v874
        %s879 = scalar_lea.vmem [#allocation9], 64
        %v880 = vld [vmem:[%s879] sm:$0xf]
        %v881 = vld [vmem:[%s879 + $0x4] sm:$0xf]
        %v882 = vld [vmem:[%s879 + $0x8] sm:$0xf]
        %v883 = vld [vmem:[%s879 + $0xc] sm:$0xf]
        %v884 = vld [vmem:[%s879 + $0x10] sm:$0xf]
        %v885 = vld [vmem:[%s879 + $0x14] sm:$0xf]
        %v886 = vld [vmem:[%s879 + $0x18] sm:$0xf]
        %v887 = vld [vmem:[%s879 + $0x1c] sm:$0xf]
        %v896 = vunpack.c.l.b16 %v880
        %v897 = vunpack.c.l.b16 %v881
        %v898 = vunpack.c.l.b16 %v882
        %v899 = vunpack.c.l.b16 %v883
        %v900 = vunpack.c.l.b16 %v884
        %v901 = vunpack.c.l.b16 %v885
        %v902 = vunpack.c.l.b16 %v886
        %v903 = vunpack.c.l.b16 %v887
        %v904 = vpack.c.b16 %v897, %v896
        %v905 = vpack.c.b16 %v899, %v898
        %v906 = vpack.c.b16 %v901, %v900
        %v907 = vpack.c.b16 %v903, %v902
        %v913 = vsel %vm752, %v878, 0
        %915 = vmatpush.bf16.msra.mxu0 0
        %916 = vmatpush.bf16.msra.mxu0 0
        %917 = vmatpush.bf16.msra.mxu0 0
        %918 = vmatpush.bf16.msra.mxu0 0
        %919 = vmatpush.bf16.msra.mxu0 %v907
        %920 = vmatpush.bf16.msra.mxu0 %v906
        %921 = vmatpush.bf16.msra.mxu0 %v905
        %922 = vmatpush.bf16.msra.mxu0 %v904
        %923 = vmatmul.bf16.gmra.mxu0 %v913
        %v924 = vpop.f32.mrf.mxu0
        %v925 = vadd.f32 0.0, %v924
        %v926 = vpop.f32.mrf.mxu0
        %v927 = vadd.f32 0.0, %v926
        %928 = vdwg.mxu0
        %v929 = vadd.f32 %v851, %v925
        %v930 = vadd.f32 %v852, %v927
        %v931 = vmax.f32 %v929, 0.0
        %v932 = vmax.f32 %v930, 0.0
        %v933 = vpack.c.bf16 %v932, %v931
        %v934 = vld [vmem:[#allocation15] sm:$0x1]
        %v935 = vld [vmem:[#allocation12] sm:$0xf]
        %vm936 = vcmask 130048
        %v938 = vsel %vm936, %v935, 0
        %940 = vmatpush.bf16.msra.mxu0 0
        %941 = vmatpush.bf16.msra.mxu0 0
        %942 = vmatpush.bf16.msra.mxu0 0
        %943 = vmatpush.bf16.msra.mxu0 0
        %944 = vmatpush.bf16.msra.mxu0 0
        %945 = vmatpush.bf16.msra.mxu0 0
        %946 = vmatpush.bf16.msra.mxu0 0
        %947 = vmatpush.bf16.msra.mxu0 %v933
        %948 = vmatmul.bf16.gmra.mxu0 %v938
        %v949 = vpop.f32.mrf.mxu0
        %v950 = vadd.f32 0.0, %v949
        %v951 = vpop.f32.mrf.mxu0
        %952 = vdwg.mxu0
        %v953 = vpack.c.bf16 %v950, %v950
        %v954 = vld [vmem:[#allocation14] sm:$0xf]
        %v955 = vld [vmem:[#allocation14 + $0x4] sm:$0xf]
        %v956 = vld [vmem:[#allocation14 + $0x8] sm:$0xf]
        %v957 = vld [vmem:[#allocation14 + $0xc] sm:$0xf]
        %v958 = vld [vmem:[#allocation14 + $0x10] sm:$0xf]
        %v959 = vld [vmem:[#allocation14 + $0x14] sm:$0xf]
        %v960 = vld [vmem:[#allocation14 + $0x18] sm:$0xf]
        %v961 = vld [vmem:[#allocation14 + $0x1c] sm:$0xf]
        %v970 = vunpack.c.l.b16 %v954
        %v971 = vunpack.c.l.b16 %v955
        %v972 = vunpack.c.l.b16 %v956
        %v973 = vunpack.c.l.b16 %v957
        %v974 = vunpack.c.l.b16 %v958
        %v975 = vunpack.c.l.b16 %v959
        %v976 = vunpack.c.l.b16 %v960
        %v977 = vunpack.c.l.b16 %v961
        %v978 = vpack.c.b16 %v971, %v970
        %v979 = vpack.c.b16 %v973, %v972
        %v980 = vpack.c.b16 %v975, %v974
        %v981 = vpack.c.b16 %v977, %v976
        %v987 = vsel %vm752, %v953, 0
        %989 = vmatpush.bf16.msra.mxu0 0
        %990 = vmatpush.bf16.msra.mxu0 0
        %991 = vmatpush.bf16.msra.mxu0 0
        %992 = vmatpush.bf16.msra.mxu0 0
        %993 = vmatpush.bf16.msra.mxu0 %v981
        %994 = vmatpush.bf16.msra.mxu0 %v980
        %995 = vmatpush.bf16.msra.mxu0 %v979
        %996 = vmatpush.bf16.msra.mxu0 %v978
        %997 = vmatmul.bf16.gmra.mxu0 %v987
        %v998 = vpop.f32.mrf.mxu0
        %v999 = vadd.f32 0.0, %v998
        %v1000 = vpop.f32.mrf.mxu0
        %1001 = vdwg.mxu0
        %v1003 = vperm.slane %v934, 0
        %v1005 = vadd.f32 %v1003, %v999
        %s1006 = scalar_lea.vmem [#allocation12], 4
        %v1007 = vld [vmem:[%s1006] sm:$0xf]
        %v1009 = vsel %vm936, %v1007, 0
        %1011 = vmatpush.bf16.msra.mxu0 0
        %1012 = vmatpush.bf16.msra.mxu0 0
        %1013 = vmatpush.bf16.msra.mxu0 0
        %1014 = vmatpush.bf16.msra.mxu0 0
        %1015 = vmatpush.bf16.msra.mxu0 0
        %1016 = vmatpush.bf16.msra.mxu0 0
        %1017 = vmatpush.bf16.msra.mxu0 0
        %1018 = vmatpush.bf16.msra.mxu0 %v933
        %1019 = vmatmul.bf16.gmra.mxu0 %v1009
        %v1020 = vpop.f32.mrf.mxu0
        %v1021 = vadd.f32 0.0, %v1020
        %v1022 = vpop.f32.mrf.mxu0
        %1023 = vdwg.mxu0
        %v1024 = vpack.c.bf16 %v1021, %v1021
        %s1025 = scalar_lea.vmem [#allocation14], 32
        %v1026 = vld [vmem:[%s1025] sm:$0xf]
        %v1027 = vld [vmem:[%s1025 + $0x4] sm:$0xf]
        %v1028 = vld [vmem:[%s1025 + $0x8] sm:$0xf]
        %v1029 = vld [vmem:[%s1025 + $0xc] sm:$0xf]
        %v1030 = vld [vmem:[%s1025 + $0x10] sm:$0xf]
        %v1031 = vld [vmem:[%s1025 + $0x14] sm:$0xf]
        %v1032 = vld [vmem:[%s1025 + $0x18] sm:$0xf]
        %v1033 = vld [vmem:[%s1025 + $0x1c] sm:$0xf]
        %v1042 = vunpack.c.l.b16 %v1026
        %v1043 = vunpack.c.l.b16 %v1027
        %v1044 = vunpack.c.l.b16 %v1028
        %v1045 = vunpack.c.l.b16 %v1029
        %v1046 = vunpack.c.l.b16 %v1030
        %v1047 = vunpack.c.l.b16 %v1031
        %v1048 = vunpack.c.l.b16 %v1032
        %v1049 = vunpack.c.l.b16 %v1033
        %v1050 = vpack.c.b16 %v1043, %v1042
        %v1051 = vpack.c.b16 %v1045, %v1044
        %v1052 = vpack.c.b16 %v1047, %v1046
        %v1053 = vpack.c.b16 %v1049, %v1048
        %v1059 = vsel %vm752, %v1024, 0
        %1061 = vmatpush.bf16.msra.mxu0 0
        %1062 = vmatpush.bf16.msra.mxu0 0
        %1063 = vmatpush.bf16.msra.mxu0 0
        %1064 = vmatpush.bf16.msra.mxu0 0
        %1065 = vmatpush.bf16.msra.mxu0 %v1053
        %1066 = vmatpush.bf16.msra.mxu0 %v1052
        %1067 = vmatpush.bf16.msra.mxu0 %v1051
        %1068 = vmatpush.bf16.msra.mxu0 %v1050
        %1069 = vmatmul.bf16.gmra.mxu0 %v1059
        %v1070 = vpop.f32.mrf.mxu0
        %v1071 = vadd.f32 0.0, %v1070
        %v1072 = vpop.f32.mrf.mxu0
        %1073 = vdwg.mxu0
        %v1074 = vadd.f32 %v1005, %v1071
        %s1075 = scalar_lea.vmem [#allocation12], 8
        %v1076 = vld [vmem:[%s1075] sm:$0xf]
        %v1078 = vsel %vm936, %v1076, 0
        %1080 = vmatpush.bf16.msra.mxu0 0
        %1081 = vmatpush.bf16.msra.mxu0 0
        %1082 = vmatpush.bf16.msra.mxu0 0
        %1083 = vmatpush.bf16.msra.mxu0 0
        %1084 = vmatpush.bf16.msra.mxu0 0
        %1085 = vmatpush.bf16.msra.mxu0 0
        %1086 = vmatpush.bf16.msra.mxu0 0
        %1087 = vmatpush.bf16.msra.mxu0 %v933
        %1088 = vmatmul.bf16.gmra.mxu0 %v1078
        %v1089 = vpop.f32.mrf.mxu0
        %v1090 = vadd.f32 0.0, %v1089
        %v1091 = vpop.f32.mrf.mxu0
        %1092 = vdwg.mxu0
        %v1093 = vpack.c.bf16 %v1090, %v1090
        %s1094 = scalar_lea.vmem [#allocation14], 64
        %v1095 = vld [vmem:[%s1094] sm:$0xf]
        %v1096 = vld [vmem:[%s1094 + $0x4] sm:$0xf]
        %v1097 = vld [vmem:[%s1094 + $0x8] sm:$0xf]
        %v1098 = vld [vmem:[%s1094 + $0xc] sm:$0xf]
        %v1099 = vld [vmem:[%s1094 + $0x10] sm:$0xf]
        %v1100 = vld [vmem:[%s1094 + $0x14] sm:$0xf]
        %v1101 = vld [vmem:[%s1094 + $0x18] sm:$0xf]
        %v1102 = vld [vmem:[%s1094 + $0x1c] sm:$0xf]
        %v1111 = vunpack.c.l.b16 %v1095
        %v1112 = vunpack.c.l.b16 %v1096
        %v1113 = vunpack.c.l.b16 %v1097
        %v1114 = vunpack.c.l.b16 %v1098
        %v1115 = vunpack.c.l.b16 %v1099
        %v1116 = vunpack.c.l.b16 %v1100
        %v1117 = vunpack.c.l.b16 %v1101
        %v1118 = vunpack.c.l.b16 %v1102
        %v1119 = vpack.c.b16 %v1112, %v1111
        %v1120 = vpack.c.b16 %v1114, %v1113
        %v1121 = vpack.c.b16 %v1116, %v1115
        %v1122 = vpack.c.b16 %v1118, %v1117
        %v1128 = vsel %vm752, %v1093, 0
        %1130 = vmatpush.bf16.msra.mxu0 0
        %1131 = vmatpush.bf16.msra.mxu0 0
        %1132 = vmatpush.bf16.msra.mxu0 0
        %1133 = vmatpush.bf16.msra.mxu0 0
        %1134 = vmatpush.bf16.msra.mxu0 %v1122
        %1135 = vmatpush.bf16.msra.mxu0 %v1121
        %1136 = vmatpush.bf16.msra.mxu0 %v1120
        %1137 = vmatpush.bf16.msra.mxu0 %v1119
        %1138 = vmatmul.bf16.gmra.mxu0 %v1128
        %v1139 = vpop.f32.mrf.mxu0
        %v1140 = vadd.f32 0.0, %v1139
        %v1141 = vpop.f32.mrf.mxu0
        %1142 = vdwg.mxu0
        %v1143 = vadd.f32 %v1074, %v1140
        %v1144 = vmax.f32 %v1143, 0.0
        %v1145 = vpack.c.bf16 %v1144, %v1144
        %v1146 = vld [vmem:[%s10] sm:$0x1]
        %v1147 = vld [vmem:[%s8] sm:$0x3]
        %vm1148 = vcmask 64512
        %v1150 = vsel %vm1148, %v1147, 0
        %vm1152 = vcmask 1043456
        %v1154 = vsel %vm1152, %v1145, 0
        %1156 = vmatpush.bf16.msra.mxu0 0
        %1157 = vmatpush.bf16.msra.mxu0 0
        %1158 = vmatpush.bf16.msra.mxu0 0
        %1159 = vmatpush.bf16.msra.mxu0 0
        %1160 = vmatpush.bf16.msra.mxu0 0
        %1161 = vmatpush.bf16.msra.mxu0 0
        %1162 = vmatpush.bf16.msra.mxu0 0
        %1163 = vmatpush.bf16.msra.mxu0 %v1154
        %1164 = vmatmul.bf16.gmra.mxu0 %v1150
        %v1165 = vpop.f32.mrf.mxu0
        %v1166 = vadd.f32 0.0, %v1165
        %v1167 = vpop.f32.mrf.mxu0
        %1168 = vdwg.mxu0
        %v1169 = vpack.c.bf16 %v1166, %v1166
        %v1170 = vld [vmem:[#allocation17] sm:$0xf]
        %v1171 = vld [vmem:[#allocation17 + $0x4] sm:$0xf]
        %v1172 = vld [vmem:[#allocation17 + $0x8] sm:$0xf]
        %v1173 = vld [vmem:[#allocation17 + $0xc] sm:$0xf]
        %v1174 = vld [vmem:[#allocation17 + $0x10] sm:$0xf]
        %v1175 = vld [vmem:[#allocation17 + $0x14] sm:$0xf]
        %v1176 = vld [vmem:[#allocation17 + $0x18] sm:$0xf]
        %v1177 = vld [vmem:[#allocation17 + $0x1c] sm:$0xf]
        %v1186 = vunpack.c.l.b16 %v1170
        %v1187 = vunpack.c.l.b16 %v1171
        %v1188 = vunpack.c.l.b16 %v1172
        %v1189 = vunpack.c.l.b16 %v1173
        %v1190 = vunpack.c.l.b16 %v1174
        %v1191 = vunpack.c.l.b16 %v1175
        %v1192 = vunpack.c.l.b16 %v1176
        %v1193 = vunpack.c.l.b16 %v1177
        %v1194 = vpack.c.b16 %v1187, %v1186
        %v1195 = vpack.c.b16 %v1189, %v1188
        %v1196 = vpack.c.b16 %v1191, %v1190
        %v1197 = vpack.c.b16 %v1193, %v1192
        %v1203 = vsel %vm752, %v1169, 0
        %1205 = vmatpush.bf16.msra.mxu0 0
        %1206 = vmatpush.bf16.msra.mxu0 0
        %1207 = vmatpush.bf16.msra.mxu0 0
        %1208 = vmatpush.bf16.msra.mxu0 0
        %1209 = vmatpush.bf16.msra.mxu0 %v1197
        %1210 = vmatpush.bf16.msra.mxu0 %v1196
        %1211 = vmatpush.bf16.msra.mxu0 %v1195
        %1212 = vmatpush.bf16.msra.mxu0 %v1194
        %1213 = vmatmul.bf16.gmra.mxu0 %v1203
        %v1214 = vpop.f32.mrf.mxu0
        %v1215 = vadd.f32 0.0, %v1214
        %v1216 = vpop.f32.mrf.mxu0
        %1217 = vdwg.mxu0
        %v1219 = vperm.slane %v1146, 0
        %v1221 = vadd.f32 %v1219, %v1215
        %s1222 = scalar_lea.vmem %s8, 2
        %v1223 = vld [vmem:[%s1222] sm:$0x3]
        %v1225 = vsel %vm1148, %v1223, 0
        %1227 = vmatpush.bf16.msra.mxu0 0
        %1228 = vmatpush.bf16.msra.mxu0 0
        %1229 = vmatpush.bf16.msra.mxu0 0
        %1230 = vmatpush.bf16.msra.mxu0 0
        %1231 = vmatpush.bf16.msra.mxu0 0
        %1232 = vmatpush.bf16.msra.mxu0 0
        %1233 = vmatpush.bf16.msra.mxu0 0
        %1234 = vmatpush.bf16.msra.mxu0 %v1154
        %1235 = vmatmul.bf16.gmra.mxu0 %v1225
        %v1236 = vpop.f32.mrf.mxu0
        %v1237 = vadd.f32 0.0, %v1236
        %v1238 = vpop.f32.mrf.mxu0
        %1239 = vdwg.mxu0
        %v1240 = vpack.c.bf16 %v1237, %v1237
        %s1241 = scalar_lea.vmem [#allocation17], 32
        %v1242 = vld [vmem:[%s1241] sm:$0xf]
        %v1243 = vld [vmem:[%s1241 + $0x4] sm:$0xf]
        %v1244 = vld [vmem:[%s1241 + $0x8] sm:$0xf]
        %v1245 = vld [vmem:[%s1241 + $0xc] sm:$0xf]
        %v1246 = vld [vmem:[%s1241 + $0x10] sm:$0xf]
        %v1247 = vld [vmem:[%s1241 + $0x14] sm:$0xf]
        %v1248 = vld [vmem:[%s1241 + $0x18] sm:$0xf]
        %v1249 = vld [vmem:[%s1241 + $0x1c] sm:$0xf]
        %v1258 = vunpack.c.l.b16 %v1242
        %v1259 = vunpack.c.l.b16 %v1243
        %v1260 = vunpack.c.l.b16 %v1244
        %v1261 = vunpack.c.l.b16 %v1245
        %v1262 = vunpack.c.l.b16 %v1246
        %v1263 = vunpack.c.l.b16 %v1247
        %v1264 = vunpack.c.l.b16 %v1248
        %v1265 = vunpack.c.l.b16 %v1249
        %v1266 = vpack.c.b16 %v1259, %v1258
        %v1267 = vpack.c.b16 %v1261, %v1260
        %v1268 = vpack.c.b16 %v1263, %v1262
        %v1269 = vpack.c.b16 %v1265, %v1264
        %v1275 = vsel %vm752, %v1240, 0
        %1277 = vmatpush.bf16.msra.mxu0 0
        %1278 = vmatpush.bf16.msra.mxu0 0
        %1279 = vmatpush.bf16.msra.mxu0 0
        %1280 = vmatpush.bf16.msra.mxu0 0
        %1281 = vmatpush.bf16.msra.mxu0 %v1269
        %1282 = vmatpush.bf16.msra.mxu0 %v1268
        %1283 = vmatpush.bf16.msra.mxu0 %v1267
        %1284 = vmatpush.bf16.msra.mxu0 %v1266
        %1285 = vmatmul.bf16.gmra.mxu0 %v1275
        %v1286 = vpop.f32.mrf.mxu0
        %v1287 = vadd.f32 0.0, %v1286
        %v1288 = vpop.f32.mrf.mxu0
        %1289 = vdwg.mxu0
        %v1290 = vadd.f32 %v1221, %v1287
        %s1291 = scalar_lea.vmem %s8, 4
        %v1292 = vld [vmem:[%s1291] sm:$0x3]
        %v1294 = vsel %vm1148, %v1292, 0
        %1296 = vmatpush.bf16.msra.mxu0 0
        %1297 = vmatpush.bf16.msra.mxu0 0
        %1298 = vmatpush.bf16.msra.mxu0 0
        %1299 = vmatpush.bf16.msra.mxu0 0
        %1300 = vmatpush.bf16.msra.mxu0 0
        %1301 = vmatpush.bf16.msra.mxu0 0
        %1302 = vmatpush.bf16.msra.mxu0 0
        %1303 = vmatpush.bf16.msra.mxu0 %v1154
        %1304 = vmatmul.bf16.gmra.mxu0 %v1294
        %v1305 = vpop.f32.mrf.mxu0
        %v1306 = vadd.f32 0.0, %v1305
        %v1307 = vpop.f32.mrf.mxu0
        %1308 = vdwg.mxu0
        %v1309 = vpack.c.bf16 %v1306, %v1306
        %s1310 = scalar_lea.vmem [#allocation17], 64
        %v1311 = vld [vmem:[%s1310] sm:$0xf]
        %v1312 = vld [vmem:[%s1310 + $0x4] sm:$0xf]
        %v1313 = vld [vmem:[%s1310 + $0x8] sm:$0xf]
        %v1314 = vld [vmem:[%s1310 + $0xc] sm:$0xf]
        %v1315 = vld [vmem:[%s1310 + $0x10] sm:$0xf]
        %v1316 = vld [vmem:[%s1310 + $0x14] sm:$0xf]
        %v1317 = vld [vmem:[%s1310 + $0x18] sm:$0xf]
        %v1318 = vld [vmem:[%s1310 + $0x1c] sm:$0xf]
        %v1327 = vunpack.c.l.b16 %v1311
        %v1328 = vunpack.c.l.b16 %v1312
        %v1329 = vunpack.c.l.b16 %v1313
        %v1330 = vunpack.c.l.b16 %v1314
        %v1331 = vunpack.c.l.b16 %v1315
        %v1332 = vunpack.c.l.b16 %v1316
        %v1333 = vunpack.c.l.b16 %v1317
        %v1334 = vunpack.c.l.b16 %v1318
        %v1335 = vpack.c.b16 %v1328, %v1327
        %v1336 = vpack.c.b16 %v1330, %v1329
        %v1337 = vpack.c.b16 %v1332, %v1331
        %v1338 = vpack.c.b16 %v1334, %v1333
        %v1344 = vsel %vm752, %v1309, 0
        %1346 = vmatpush.bf16.msra.mxu0 0
        %1347 = vmatpush.bf16.msra.mxu0 0
        %1348 = vmatpush.bf16.msra.mxu0 0
        %1349 = vmatpush.bf16.msra.mxu0 0
        %1350 = vmatpush.bf16.msra.mxu0 %v1338
        %1351 = vmatpush.bf16.msra.mxu0 %v1337
        %1352 = vmatpush.bf16.msra.mxu0 %v1336
        %1353 = vmatpush.bf16.msra.mxu0 %v1335
        %1354 = vmatmul.bf16.gmra.mxu0 %v1344
        %v1355 = vpop.f32.mrf.mxu0
        %v1356 = vadd.f32 0.0, %v1355
        %v1357 = vpop.f32.mrf.mxu0
        %1358 = vdwg.mxu0
        %v1359 = vadd.f32 %v1290, %v1356
        %v1360 = vmax.f32 %v1359, 0.0
        %v1361 = vpack.c.bf16 %v1360, %v1360
        %v1362 = vld [vmem:[%s13] sm:$0x1]
        %v1363 = vld [vmem:[%s11] sm:$0x1]
        %vm1364 = vcmask 31744
        %v1366 = vsel %vm1364, %v1363, 0
        %vm1368 = vcmask 1041408
        %v1370 = vsel %vm1368, %v1361, 0
        %1372 = vmatpush.bf16.msra.mxu0 0
        %1373 = vmatpush.bf16.msra.mxu0 0
        %1374 = vmatpush.bf16.msra.mxu0 0
        %1375 = vmatpush.bf16.msra.mxu0 0
        %1376 = vmatpush.bf16.msra.mxu0 0
        %1377 = vmatpush.bf16.msra.mxu0 0
        %1378 = vmatpush.bf16.msra.mxu0 0
        %1379 = vmatpush.bf16.msra.mxu0 %v1370
        %1380 = vmatmul.bf16.gmra.mxu0 %v1366
        %v1381 = vpop.f32.mrf.mxu0
        %v1382 = vadd.f32 0.0, %v1381
        %v1383 = vpop.f32.mrf.mxu0
        %1384 = vdwg.mxu0
        %v1385 = vpack.c.bf16 %v1382, %v1382
        %v1386 = vld [vmem:[#allocation18] sm:$0xf]
        %v1387 = vld [vmem:[#allocation18 + $0x4] sm:$0xf]
        %v1388 = vld [vmem:[#allocation18 + $0x8] sm:$0xf]
        %v1389 = vld [vmem:[#allocation18 + $0xc] sm:$0xf]
        %v1390 = vld [vmem:[#allocation18 + $0x10] sm:$0xf]
        %v1391 = vld [vmem:[#allocation18 + $0x14] sm:$0xf]
        %v1392 = vld [vmem:[#allocation18 + $0x18] sm:$0xf]
        %v1393 = vld [vmem:[#allocation18 + $0x1c] sm:$0xf]
        %v1402 = vunpack.c.l.b16 %v1386
        %v1403 = vunpack.c.l.b16 %v1387
        %v1404 = vunpack.c.l.b16 %v1388
        %v1405 = vunpack.c.l.b16 %v1389
        %v1406 = vunpack.c.l.b16 %v1390
        %v1407 = vunpack.c.l.b16 %v1391
        %v1408 = vunpack.c.l.b16 %v1392
        %v1409 = vunpack.c.l.b16 %v1393
        %v1410 = vpack.c.b16 %v1403, %v1402
        %v1411 = vpack.c.b16 %v1405, %v1404
        %v1412 = vpack.c.b16 %v1407, %v1406
        %v1413 = vpack.c.b16 %v1409, %v1408
        %v1419 = vsel %vm752, %v1385, 0
        %1421 = vmatpush.bf16.msra.mxu0 0
        %1422 = vmatpush.bf16.msra.mxu0 0
        %1423 = vmatpush.bf16.msra.mxu0 0
        %1424 = vmatpush.bf16.msra.mxu0 0
        %1425 = vmatpush.bf16.msra.mxu0 %v1413
        %1426 = vmatpush.bf16.msra.mxu0 %v1412
        %1427 = vmatpush.bf16.msra.mxu0 %v1411
        %1428 = vmatpush.bf16.msra.mxu0 %v1410
        %1429 = vmatmul.bf16.gmra.mxu0 %v1419
        %v1430 = vpop.f32.mrf.mxu0
        %v1431 = vadd.f32 0.0, %v1430
        %v1432 = vpop.f32.mrf.mxu0
        %1433 = vdwg.mxu0
        %v1435 = vperm.slane %v1362, 0
        %v1437 = vadd.f32 %v1435, %v1431
        %s1438 = scalar_lea.vmem %s11, 1
        %v1439 = vld [vmem:[%s1438] sm:$0x1]
        %v1441 = vsel %vm1364, %v1439, 0
        %1443 = vmatpush.bf16.msra.mxu0 0
        %1444 = vmatpush.bf16.msra.mxu0 0
        %1445 = vmatpush.bf16.msra.mxu0 0
        %1446 = vmatpush.bf16.msra.mxu0 0
        %1447 = vmatpush.bf16.msra.mxu0 0
        %1448 = vmatpush.bf16.msra.mxu0 0
        %1449 = vmatpush.bf16.msra.mxu0 0
        %1450 = vmatpush.bf16.msra.mxu0 %v1370
        %1451 = vmatmul.bf16.gmra.mxu0 %v1441
        %v1452 = vpop.f32.mrf.mxu0
        %v1453 = vadd.f32 0.0, %v1452
        %v1454 = vpop.f32.mrf.mxu0
        %1455 = vdwg.mxu0
        %v1456 = vpack.c.bf16 %v1453, %v1453
        %s1457 = scalar_lea.vmem [#allocation18], 32
        %v1458 = vld [vmem:[%s1457] sm:$0xf]
        %v1459 = vld [vmem:[%s1457 + $0x4] sm:$0xf]
        %v1460 = vld [vmem:[%s1457 + $0x8] sm:$0xf]
        %v1461 = vld [vmem:[%s1457 + $0xc] sm:$0xf]
        %v1462 = vld [vmem:[%s1457 + $0x10] sm:$0xf]
        %v1463 = vld [vmem:[%s1457 + $0x14] sm:$0xf]
        %v1464 = vld [vmem:[%s1457 + $0x18] sm:$0xf]
        %v1465 = vld [vmem:[%s1457 + $0x1c] sm:$0xf]
        %v1474 = vunpack.c.l.b16 %v1458
        %v1475 = vunpack.c.l.b16 %v1459
        %v1476 = vunpack.c.l.b16 %v1460
        %v1477 = vunpack.c.l.b16 %v1461
        %v1478 = vunpack.c.l.b16 %v1462
        %v1479 = vunpack.c.l.b16 %v1463
        %v1480 = vunpack.c.l.b16 %v1464
        %v1481 = vunpack.c.l.b16 %v1465
        %v1482 = vpack.c.b16 %v1475, %v1474
        %v1483 = vpack.c.b16 %v1477, %v1476
        %v1484 = vpack.c.b16 %v1479, %v1478
        %v1485 = vpack.c.b16 %v1481, %v1480
        %v1491 = vsel %vm752, %v1456, 0
        %1493 = vmatpush.bf16.msra.mxu0 0
        %1494 = vmatpush.bf16.msra.mxu0 0
        %1495 = vmatpush.bf16.msra.mxu0 0
        %1496 = vmatpush.bf16.msra.mxu0 0
        %1497 = vmatpush.bf16.msra.mxu0 %v1485
        %1498 = vmatpush.bf16.msra.mxu0 %v1484
        %1499 = vmatpush.bf16.msra.mxu0 %v1483
        %1500 = vmatpush.bf16.msra.mxu0 %v1482
        %1501 = vmatmul.bf16.gmra.mxu0 %v1491
        %v1502 = vpop.f32.mrf.mxu0
        %v1503 = vadd.f32 0.0, %v1502
        %v1504 = vpop.f32.mrf.mxu0
        %1505 = vdwg.mxu0
        %v1506 = vadd.f32 %v1437, %v1503
        %s1507 = scalar_lea.vmem %s11, 2
        %v1508 = vld [vmem:[%s1507] sm:$0x1]
        %v1510 = vsel %vm1364, %v1508, 0
        %1512 = vmatpush.bf16.msra.mxu0 0
        %1513 = vmatpush.bf16.msra.mxu0 0
        %1514 = vmatpush.bf16.msra.mxu0 0
        %1515 = vmatpush.bf16.msra.mxu0 0
        %1516 = vmatpush.bf16.msra.mxu0 0
        %1517 = vmatpush.bf16.msra.mxu0 0
        %1518 = vmatpush.bf16.msra.mxu0 0
        %1519 = vmatpush.bf16.msra.mxu0 %v1370
        %1520 = vmatmul.bf16.gmra.mxu0 %v1510
        %v1521 = vpop.f32.mrf.mxu0
        %v1522 = vadd.f32 0.0, %v1521
        %v1523 = vpop.f32.mrf.mxu0
        %1524 = vdwg.mxu0
        %v1525 = vpack.c.bf16 %v1522, %v1522
        %s1526 = scalar_lea.vmem [#allocation18], 64
        %v1527 = vld [vmem:[%s1526] sm:$0xf]
        %v1528 = vld [vmem:[%s1526 + $0x4] sm:$0xf]
        %v1529 = vld [vmem:[%s1526 + $0x8] sm:$0xf]
        %v1530 = vld [vmem:[%s1526 + $0xc] sm:$0xf]
        %v1531 = vld [vmem:[%s1526 + $0x10] sm:$0xf]
        %v1532 = vld [vmem:[%s1526 + $0x14] sm:$0xf]
        %v1533 = vld [vmem:[%s1526 + $0x18] sm:$0xf]
        %v1534 = vld [vmem:[%s1526 + $0x1c] sm:$0xf]
        %v1543 = vunpack.c.l.b16 %v1527
        %v1544 = vunpack.c.l.b16 %v1528
        %v1545 = vunpack.c.l.b16 %v1529
        %v1546 = vunpack.c.l.b16 %v1530
        %v1547 = vunpack.c.l.b16 %v1531
        %v1548 = vunpack.c.l.b16 %v1532
        %v1549 = vunpack.c.l.b16 %v1533
        %v1550 = vunpack.c.l.b16 %v1534
        %v1551 = vpack.c.b16 %v1544, %v1543
        %v1552 = vpack.c.b16 %v1546, %v1545
        %v1553 = vpack.c.b16 %v1548, %v1547
        %v1554 = vpack.c.b16 %v1550, %v1549
        %v1560 = vsel %vm752, %v1525, 0
        %1562 = vmatpush.bf16.msra.mxu0 0
        %1563 = vmatpush.bf16.msra.mxu0 0
        %1564 = vmatpush.bf16.msra.mxu0 0
        %1565 = vmatpush.bf16.msra.mxu0 0
        %1566 = vmatpush.bf16.msra.mxu0 %v1554
        %1567 = vmatpush.bf16.msra.mxu0 %v1553
        %1568 = vmatpush.bf16.msra.mxu0 %v1552
        %1569 = vmatpush.bf16.msra.mxu0 %v1551
        %1570 = vmatmul.bf16.gmra.mxu0 %v1560
        %v1571 = vpop.f32.mrf.mxu0
        %v1572 = vadd.f32 0.0, %v1571
        %v1573 = vpop.f32.mrf.mxu0
        %1574 = vdwg.mxu0
        %v1575 = vadd.f32 %v1506, %v1572
        %vm1576 = vcmp.gt.f32.partialorder %v1575, 0.0
        %v1577 = vmul.f32 %v1575, 0.2
        %v1578 = vsel %vm1576, %v1575, %v1577
        %v1579 = vld [vmem:[%s14] sm:$0x1]
        %v1581 = vperm.slane %v1579, 0
        %v1583 = vmul.f32 %v1578, %v1581
        %vm1584 = vcmask 517120
        %v1585 = vsel %vm1584, %v1583, 0.0
        %1586 = vadd.xlane.f32.xlu0 %v1585
        %v1587 = vpop.xlane.xlu0 %1586
        %v1588 = vld [vmem:[#allocation2] sm:$0x1]
        %v1590 = vperm.slane %v1588, 0
        %v1592 = vadd.f32 %v1587, %v1590
        %v1593 = vstv %s680
        %v1594 = vsub.f32 %v1592, %v1593
        %v1595 = vmul.f32 %v1594, %v1594
        %vm1596 = vcmask 1024
        %v1597 = vsel %vm1596, %v1595, 0.0
        %1598 = vadd.xlane.f32.xlu0 %v1597
        %v1599 = vpop.xlane.xlu0 %1598
        %v1600 = vrot.slane %v1599, 4
        %v1601 = vadd.f32 %v1599, %v1600
        %v1602 = vrot.slane %v1601, 2
        %v1603 = vadd.f32 %v1601, %v1602
        %v1604 = vrot.slane %v1603, 1
        %v1605 = vadd.f32 %v1603, %v1604
        %s1606 = vtos %v1605
        %s1607 = smul.f32 %s1606, 0.5
        %v1608 = vstv %s1607
        %1609 = vst [vmem:[%s662] sm:$0x1] %v1608
        %s1610 = sand.u32 %s382, 1
        %s1611 = scalar_lea.sflag [#allocation5], %s1610
        %s1612 = sand.u32 %s382, 1
        %s1613 = scalar_lea.vmem [#allocation20], %s1612
        // Predicated region
        $region125: #{tpu_custom_call.1} parent=83 // pred_check
          %p1614 = pneg %p392
        $region126: #{tpu_custom_call.1} parent=83 // pred_check_branch
          %1616 = sbr.rel (%p1614) target = $region128
        $region127: #{tpu_custom_call.1} parent=83 // pred_region
          %1618 = vsyncadd %s1611, 0
          %s1619 = scalar_lea.hbm %s16, %s38
          %s1621 = sshll.u32 %s1613, 4
          %s1622 = int_to_ptr.vmem [resolvable:$true] %s1621
          %s1623 = sshll.u32 %s1619, 4
          %s1624 = int_to_ptr.hbm [resolvable:$true] %s1623
          %1626 = dma.vmem_to_hbm [thread:$0]  %s1622, 16, %s1624, %s1611
        $region128: #{tpu_custom_call.1} parent=83 // pred_fallthru
          _
      $region84: #{tpu_custom_call.1} parent=5 // pred_fallthru
        _
      %p1627 = scmp.le.s32.totalorder 2, %s33
      // Predicated region
      $region129: #{tpu_custom_call.1} parent=5 // pred_check
        %p1628 = pneg %p1627
      $region130: #{tpu_custom_call.1} parent=5 // pred_check_branch
        %1630 = sbr.rel (%p1628) target = $region132
      $region131: #{tpu_custom_call.1} parent=5 // pred_region
        %s1631 = ssub.s32 %s33, 2
        // Predicated region
        $region133: #{tpu_custom_call.1} parent=131 // pred_check
          %p1632 = pneg %p398
        $region134: #{tpu_custom_call.1} parent=131 // pred_check_branch
          %1634 = sbr.rel (%p1632) target = $region136
        $region135: #{tpu_custom_call.1} parent=131 // pred_region
          %s1635 = sand.u32 %s383, 1
          %s1636 = scalar_lea.sflag [#allocation5], %s1635
          %s1637 = sand.u32 %s383, 1
          %s1638 = scalar_lea.vmem [#allocation20], %s1637
          %1640 = dma.done %s1636, 16
        $region136: #{tpu_custom_call.1} parent=131 // pred_fallthru
          _
      $region132: #{tpu_custom_call.1} parent=5 // pred_fallthru
        _
    $region6: #{tpu_custom_call.1} parent=1 // loop_footer
      %s37 = sadd.s32 1, %s33
    $region7: #{tpu_custom_call.1} parent=1 // loop_footer_branch
      %32 = sbr.rel target = $region3
    $region8: #{tpu_custom_call.1} parent=1 // loop_exit
      _
    %1641 = vsyncpa [#allocation4], 1
    %s1642 = scalar_lea.sflag [#allocation4], 1
    %1643 = vsyncpa %s1642, 1
    %1644 = vsyncpa [#allocation7], 1
    %1645 = vsyncpa [#allocation10], 1
    %1646 = vsyncpa [#allocation13], 1
    %1647 = vsyncpa [#allocation16], 1
    %1648 = vsyncpa [#allocation19], 1
    %1649 = vsyncpa [#allocation5], 1
    %s1650 = scalar_lea.sflag [#allocation5], 1
    %1651 = vsyncpa %s1650, 1

</llo_original>
